<compile_context>
chip_gen: v5e
topology: v5e:2x2
jax: 0.10.0
libtpu: 0.0.40
codegen_flags: <defaults>
</compile_context>

<pallas_src>
import functools

import jax
import jax.numpy as jnp
from jax.experimental import pallas as pl
from jax.experimental.pallas import tpu as pltpu

EPS = 1e-5
LANE = 128


def _round_up(x, m):
    return (x + m - 1) // m * m


def _pick_tn(c):
    for t in (512, 256, 128):
        if c % t == 0:
            return t
    return c


def _pad_to(a, shape):
    pads = [(0, t - s) for s, t in zip(a.shape, shape)]
    if all(p == (0, 0) for p in pads):
        return a
    return jnp.pad(a, pads)


# ---------------------------------------------------------------------------
# Pallas kernels
# ---------------------------------------------------------------------------
def _mm_stats_kernel(x_ref, w_ref, y_ref, st_ref):
    """y = x @ w (bf16 operands, f32 acc) + per-channel sum / sum-sq epilogue."""
    y = jnp.dot(x_ref[...], w_ref[...], preferred_element_type=jnp.float32)
    y_ref[...] = y
    s = jnp.sum(y, axis=0, keepdims=True)
    q = jnp.sum(y * y, axis=0, keepdims=True)
    st_ref[...] = jnp.concatenate(
        [s, q, jnp.zeros((6, y.shape[1]), jnp.float32)], axis=0)


def _bn_mm_stats_kernel(y_ref, sc_ref, sh_ref, w_ref, o_ref, st_ref,
                        *, m_valid, m_total):
    """a = relu(y*scale+shift)  (previous layer's BN fused in), o = a @ w,
    plus per-channel stats epilogue for the *next* BN."""
    a = jnp.maximum(y_ref[...] * sc_ref[...] + sh_ref[...], 0.0)
    if m_valid != m_total:
        # zero out padded tail rows so they don't pollute the batch statistics
        tm = y_ref.shape[0]
        row = pl.program_id(0) * tm + jax.lax.broadcasted_iota(
            jnp.int32, a.shape, 0)
        a = jnp.where(row < m_valid, a, 0.0)
    o = jnp.dot(a.astype(jnp.bfloat16), w_ref[...],
                preferred_element_type=jnp.float32)
    o_ref[...] = o
    s = jnp.sum(o, axis=0, keepdims=True)
    q = jnp.sum(o * o, axis=0, keepdims=True)
    st_ref[...] = jnp.concatenate(
        [s, q, jnp.zeros((6, o.shape[1]), jnp.float32)], axis=0)


def _conv3x3_bn_stats_kernel(y_ref, sc_ref, sh_ref, w_ref, o_ref, st_ref):
    """Per-image 3x3 conv (stride=1, pad=1) as 9 accumulated matmuls.
    The previous BN+ReLU is fused in; the spatial halo is built in VMEM
    (no materialized im2col / no HBM padded copy)."""
    hh, ww, c = y_ref.shape
    cout = o_ref.shape[-1]
    a = jnp.maximum(y_ref[...] * sc_ref[...] + sh_ref[...], 0.0)     # (H, W, C)
    zr = jnp.zeros((1, ww, c), jnp.float32)
    a = jnp.concatenate([zr, a, zr], axis=0)                         # (H+2, W, C)
    zc = jnp.zeros((hh + 2, 1, c), jnp.float32)
    a = jnp.concatenate([zc, a, zc], axis=1)                         # (H+2, W+2, C)
    acc = jnp.zeros((hh * ww, cout), jnp.float32)
    for dy in range(3):
        for dx in range(3):
            tap = a[dy:dy + hh, dx:dx + ww, :].reshape(hh * ww, c)
            k = dy * 3 + dx
            acc = acc + jnp.dot(tap.astype(jnp.bfloat16),
                                w_ref[k * c:(k + 1) * c, :],
                                preferred_element_type=jnp.float32)
    o_ref[...] = acc.reshape(hh, ww, cout)
    s = jnp.sum(acc, axis=0, keepdims=True)
    q = jnp.sum(acc * acc, axis=0, keepdims=True)
    st_ref[...] = jnp.concatenate(
        [s, q, jnp.zeros((6, cout), jnp.float32)], axis=0)


def _bn_res_relu_kernel(y_ref, r_ref, sc_ref, sh_ref, o_ref):
    """Final BN normalize + residual add + ReLU, fused, tiled over rows/chans."""
    o_ref[...] = jnp.maximum(
        y_ref[...] * sc_ref[...] + sh_ref[...] + r_ref[...], 0.0)


# ---------------------------------------------------------------------------
# pallas_call wrappers
# ---------------------------------------------------------------------------
def conv1x1_stats(x_bf, w_bf, tm):
    m_pad, k = x_bf.shape
    n = w_bf.shape[1]
    tn = _pick_tn(n)
    gm, gn = m_pad // tm, n // tn
    return pl.pallas_call(
        _mm_stats_kernel,
        out_shape=(jax.ShapeDtypeStruct((m_pad, n), jnp.float32),
                   jax.ShapeDtypeStruct((gm, 8, n), jnp.float32)),
        grid=(gm, gn),
        in_specs=[pl.BlockSpec((tm, k), lambda i, j: (i, 0)),
                  pl.BlockSpec((k, tn), lambda i, j: (0, j))],
        out_specs=(pl.BlockSpec((tm, tn), lambda i, j: (i, j)),
                   pl.BlockSpec((None, 8, tn), lambda i, j: (i, 0, j))),
        compiler_params=pltpu.CompilerParams(
            dimension_semantics=("parallel", "parallel")),
    )(x_bf, w_bf)


def bn_conv1x1_stats(y, scale, shift, w_bf, tm, m_valid):
    m_pad, k = y.shape
    n = w_bf.shape[1]
    tn = _pick_tn(n)
    gm, gn = m_pad // tm, n // tn
    kern = functools.partial(_bn_mm_stats_kernel,
                             m_valid=m_valid, m_total=m_pad)
    return pl.pallas_call(
        kern,
        out_shape=(jax.ShapeDtypeStruct((m_pad, n), jnp.float32),
                   jax.ShapeDtypeStruct((gm, 8, n), jnp.float32)),
        grid=(gm, gn),
        in_specs=[pl.BlockSpec((tm, k), lambda i, j: (i, 0)),
                  pl.BlockSpec((1, k), lambda i, j: (0, 0)),
                  pl.BlockSpec((1, k), lambda i, j: (0, 0)),
                  pl.BlockSpec((k, tn), lambda i, j: (0, j))],
        out_specs=(pl.BlockSpec((tm, tn), lambda i, j: (i, j)),
                   pl.BlockSpec((None, 8, tn), lambda i, j: (i, 0, j))),
        compiler_params=pltpu.CompilerParams(
            dimension_semantics=("parallel", "parallel")),
    )(y, scale, shift, w_bf)


def bn_conv3x3_stats(y_img, scale, shift, w_bf):
    n, h, w, c = y_img.shape
    cout = w_bf.shape[1]
    return pl.pallas_call(
        _conv3x3_bn_stats_kernel,
        out_shape=(jax.ShapeDtypeStruct((n, h, w, cout), jnp.float32),
                   jax.ShapeDtypeStruct((n, 8, cout), jnp.float32)),
        grid=(n,),
        in_specs=[pl.BlockSpec((None, h, w, c), lambda b: (b, 0, 0, 0)),
                  pl.BlockSpec((1, c), lambda b: (0, 0)),
                  pl.BlockSpec((1, c), lambda b: (0, 0)),
                  pl.BlockSpec((9 * c, cout), lambda b: (0, 0))],
        out_specs=(pl.BlockSpec((None, h, w, cout), lambda b: (b, 0, 0, 0)),
                   pl.BlockSpec((None, 8, cout), lambda b: (b, 0, 0))),
        compiler_params=pltpu.CompilerParams(
            dimension_semantics=("parallel",)),
    )(y_img, scale, shift, w_bf)


def bn_residual_relu(y, res, scale, shift, tm):
    m_pad, n = y.shape
    tn = _pick_tn(n)
    gm, gn = m_pad // tm, n // tn
    return pl.pallas_call(
        _bn_res_relu_kernel,
        out_shape=jax.ShapeDtypeStruct((m_pad, n), jnp.float32),
        grid=(gm, gn),
        in_specs=[pl.BlockSpec((tm, tn), lambda i, j: (i, j)),
                  pl.BlockSpec((tm, tn), lambda i, j: (i, j)),
                  pl.BlockSpec((1, tn), lambda i, j: (0, j)),
                  pl.BlockSpec((1, tn), lambda i, j: (0, j))],
        out_specs=pl.BlockSpec((tm, tn), lambda i, j: (i, j)),
        compiler_params=pltpu.CompilerParams(
            dimension_semantics=("parallel", "parallel")),
    )(y, res, scale, shift)


# ---------------------------------------------------------------------------
# Glue
# ---------------------------------------------------------------------------
def _fold_bn(stats, count, gamma, beta):
    """Reduce per-tile (sum, sum-sq) partials -> per-channel scale/shift."""
    s = jnp.sum(stats[:, 0, :], axis=0)
    q = jnp.sum(stats[:, 1, :], axis=0)
    mean = s / count
    var = jnp.maximum(q / count - mean * mean, 0.0)
    scale = gamma * jax.lax.rsqrt(var + EPS)
    shift = beta - mean * scale
    return scale[None, :], shift[None, :]


@jax.jit
def bottleneck_forward(x_nchw, params):
    n, cin, h, w = x_nchw.shape
    cmid = params["w1"].shape[1]
    cout = params["w3"].shape[1]
    assert cin == cout, "shortcut=None / stride=1 requires in_planes == 4*planes"

    cin_p = _round_up(cin, LANE)
    cmid_p = _round_up(cmid, LANE)
    cout_p = _round_up(cout, LANE)
    m = n * h * w
    tm = 256 if m >= 256 else _round_up(m, 8)
    m_pad = _round_up(m, tm)

    # NCHW -> NHWC -> (M, C); pad rows to the tile multiple and channels to
    # lane multiples (padded rows/channels are zero and masked where needed).
    x_flat = jnp.transpose(x_nchw, (0, 2, 3, 1)).astype(jnp.float32).reshape(m, cin)
    x_res = _pad_to(x_flat, (m_pad, cout_p))            # f32 residual
    x_bf = x_res.astype(jnp.bfloat16)                   # bf16 matmul operand (cin_p == cout_p)

    w1 = _pad_to(params["w1"], (cin_p, cmid_p)).astype(jnp.bfloat16)
    w2 = _pad_to(params["w2"], (3, 3, cmid_p, cmid_p)).reshape(
        9 * cmid_p, cmid_p).astype(jnp.bfloat16)
    w3 = _pad_to(params["w3"], (cmid_p, cout_p)).astype(jnp.bfloat16)
    g1, b1 = _pad_to(params["g1"], (cmid_p,)), _pad_to(params["b1"], (cmid_p,))
    g2, b2 = _pad_to(params["g2"], (cmid_p,)), _pad_to(params["b2"], (cmid_p,))
    g3, b3 = _pad_to(params["g3"], (cout_p,)), _pad_to(params["b3"], (cout_p,))

    # conv1 (1x1) + BN1 stat accumulation in the matmul epilogue
    y1, st1 = conv1x1_stats(x_bf, w1, tm)
    sc1, sh1 = _fold_bn(st1, float(m), g1, b1)

    # conv2 (3x3): BN1 normalize+ReLU fused in, halo built in VMEM,
    # 9 accumulated tap matmuls; BN2 stats in the epilogue.
    y1_img = y1[:m].reshape(n, h, w, cmid_p)
    y2, st2 = bn_conv3x3_stats(y1_img, sc1, sh1, w2)
    sc2, sh2 = _fold_bn(st2, float(m), g2, b2)

    # conv3 (1x1): BN2 normalize+ReLU fused in; BN3 stats in the epilogue.
    y2_flat = _pad_to(y2.reshape(m, cmid_p), (m_pad, cmid_p))
    y3, st3 = bn_conv1x1_stats(y2_flat, sc2, sh2, w3, tm, m_valid=m)
    sc3, sh3 = _fold_bn(st3, float(m), g3, b3)

    # BN3 normalize + residual add + ReLU, fused and tiled.
    out = bn_residual_relu(y3, x_res, sc3, sh3, tm)
    out = out[:m, :cout].reshape(n, h, w, cout)
    return jnp.transpose(out, (0, 3, 1, 2))             # back to NCHW


# ---------------------------------------------------------------------------
# Pure-JAX reference (same bf16-operand / f32-accumulate precision)
# ---------------------------------------------------------------------------
def _bn_ref(y, g, b):
    mean = jnp.mean(y, axis=0, keepdims=True)
    var = jnp.mean((y - mean) ** 2, axis=0, keepdims=True)
    return (y - mean) * jax.lax.rsqrt(var + EPS) * g + b


def _im2col_3x3(x_nhwc):
    n, h, w, c = x_nhwc.shape
    xp = jnp.pad(x_nhwc, ((0, 0), (1, 1), (1, 1), (0, 0)))
    taps = [xp[:, dy:dy + h, dx:dx + w, :] for dy in range(3) for dx in range(3)]
    return jnp.stack(taps, axis=3).reshape(n * h * w, 9 * c)


def bottleneck_ref(x_nchw, params):
    n, cin, h, w = x_nchw.shape
    planes = params["w1"].shape[1]
    bf = jnp.bfloat16
    x_flat = jnp.transpose(x_nchw, (0, 2, 3, 1)).astype(jnp.float32).reshape(-1, cin)

    y = jnp.dot(x_flat.astype(bf), params["w1"].astype(bf),
                preferred_element_type=jnp.float32)
    a = jnp.maximum(_bn_ref(y, params["g1"], params["b1"]), 0.0).astype(bf)
    patches = _im2col_3x3(a.reshape(n, h, w, planes))
    y = jnp.dot(patches, params["w2"].reshape(9 * planes, planes).astype(bf),
                preferred_element_type=jnp.float32)
    a = jnp.maximum(_bn_ref(y, params["g2"], params["b2"]), 0.0).astype(bf)
    y = jnp.dot(a, params["w3"].astype(bf), preferred_element_type=jnp.float32)
    y = jnp.maximum(_bn_ref(y, params["g3"], params["b3"]) + x_flat, 0.0)
    return jnp.transpose(y.reshape(n, h, w, 4 * planes), (0, 3, 1, 2))


# ---------------------------------------------------------------------------
def init_params(key, in_planes, planes):
    """Synthetic parameters. PyTorch conv weights (out, in, kh, kw) are stored
    pre-transposed to matmul-ready layouts: (in, out) for 1x1, (kh, kw, in, out)
    for 3x3. BatchNorm params match PyTorch defaults (weight=1, bias=0)."""
    k1, k2, k3 = jax.random.split(key, 3)
    out_planes = planes * 4
    w1 = 0.1 * jax.random.normal(k1, (in_planes, planes), jnp.float32)
    w2 = 0.1 * jax.random.normal(k2, (3, 3, planes, planes), jnp.float32)
    w3 = 0.1 * jax.random.normal(k3, (planes, out_planes), jnp.float32)
    return {
        "w1": w1, "w2": w2, "w3": w3,
        "g1": jnp.ones((planes,), jnp.float32),
        "b1": jnp.zeros((planes,), jnp.float32),
        "g2": jnp.ones((planes,), jnp.float32),
        "b2": jnp.zeros((planes,), jnp.float32),
        "g3": jnp.ones((out_planes,), jnp.float32),
        "b3": jnp.zeros((out_planes,), jnp.float32),
    }


if __name__ == "__main__":
    # shortcut=None and stride=1 require in_planes == planes * expansion
    planes = 4
    in_planes = planes * 4          # 16
    n, h, w = 2, 8, 8               # M = N*H*W = 128

    key = jax.random.PRNGKey(0)
    kx, kp = jax.random.split(key)
    x = jax.random.normal(kx, (n, in_planes, h, w), jnp.float32)  # NCHW input
    params = init_params(kp, in_planes, planes)

    out = jax.block_until_ready(bottleneck_forward(x, params))
    ref = jax.block_until_ready(bottleneck_ref(x, params))

    assert out.shape == (n, in_planes, h, w)
    assert jnp.allclose(out, ref, atol=1e-2, rtol=1e-2), (
        f"mismatch vs reference, max abs err {jnp.max(jnp.abs(out - ref))}")

    print("KERNEL_OK")
</pallas_src>

<mosaic_0001>
module attributes {stable_mosaic.version = 11 : i64} {
  func.func @_mm_stats_kernel(%arg0: i32, %arg1: i32, %arg2: memref<128x128xbf16, #tpu.memory_space<vmem>>, %arg3: memref<128x128xbf16, #tpu.memory_space<vmem>>, %arg4: memref<128x128xf32, #tpu.memory_space<vmem>>, %arg5: memref<1x8x128xf32, #tpu.memory_space<vmem>>) attributes {dimension_semantics = [#tpu.dimension_semantics<parallel>, #tpu.dimension_semantics<parallel>], iteration_bounds = array<i64: 1, 1>, scalar_prefetch = 0 : i64, scratch_operands = 0 : i64, tpu.core_type = #tpu.core_type<tc>, window_params = [{transform_indices = @transform_0, window_bounds = array<i64: 128, 128>}, {transform_indices = @transform_1, window_bounds = array<i64: 128, 128>}, {transform_indices = @transform_2, window_bounds = array<i64: 128, 128>}, {transform_indices = @transform_3, window_bounds = array<i64: 1, 8, 128>}]} {
    %c0 = arith.constant 0 : index
    %c0_0 = arith.constant 0 : index
    %0 = vector.load %arg2[%c0, %c0_0] : memref<128x128xbf16, #tpu.memory_space<vmem>>, vector<128x128xbf16>
    %c0_1 = arith.constant 0 : index
    %c0_2 = arith.constant 0 : index
    %1 = vector.load %arg3[%c0_1, %c0_2] : memref<128x128xbf16, #tpu.memory_space<vmem>>, vector<128x128xbf16>
    %cst = arith.constant dense<0.000000e+00> : vector<128x128xf32>
    %2 = tpu.matmul %0, %1, %cst {dimension_numbers = #tpu.dot_dimension_numbers<[1], [0], [0], [1], [0, 0, 1, 1], [], []>} : vector<128x128xbf16>, vector<128x128xbf16>, vector<128x128xf32> -> vector<128x128xf32>
    %c0_3 = arith.constant 0 : index
    %c0_4 = arith.constant 0 : index
    %3 = vector.load %arg4[%c0_3, %c0_4] : memref<128x128xf32, #tpu.memory_space<vmem>>, vector<128x128xf32>
    tpu.vector_store %arg4[%c0_3, %c0_4], %2 {strides = array<i32>} : memref<128x128xf32, #tpu.memory_space<vmem>>, vector<128x128xf32>,
    %cst_5 = arith.constant dense<0.000000e+00> : vector<128xf32>
    %4 = vector.multi_reduction <add>, %2, %cst_5 [0] : vector<128x128xf32> to vector<128xf32>
    %5 = vector.shape_cast %4 : vector<128xf32> to vector<1x128xf32>
    %6 = arith.mulf %2, %2 : vector<128x128xf32>
    %cst_6 = arith.constant dense<0.000000e+00> : vector<128xf32>
    %7 = vector.multi_reduction <add>, %6, %cst_6 [0] : vector<128x128xf32> to vector<128xf32>
    %8 = vector.shape_cast %7 : vector<128xf32> to vector<1x128xf32>
    %cst_7 = arith.constant 0.000000e+00 : f32
    %9 = vector.broadcast %cst_7 : f32 to vector<6x128xf32>
    %10 = tpu.concatenate %5, %8, %9 in 0 : vector<1x128xf32>, vector<1x128xf32>, vector<6x128xf32> -> vector<8x128xf32>
    %c0_8 = arith.constant 0 : index
    %c0_9 = arith.constant 0 : index
    %c0_10 = arith.constant 0 : index
    %11 = vector.load %arg5[%c0_8, %c0_9, %c0_10] : memref<1x8x128xf32, #tpu.memory_space<vmem>>, vector<1x8x128xf32>
    %12 = vector.shape_cast %11 : vector<1x8x128xf32> to vector<8x128xf32>
    %13 = vector.shape_cast %10 : vector<8x128xf32> to vector<1x8x128xf32>
    tpu.vector_store %arg5[%c0_8, %c0_9, %c0_10], %13 {strides = array<i32>} : memref<1x8x128xf32, #tpu.memory_space<vmem>>, vector<1x8x128xf32>,
    return
  }
  func.func @transform_0(%arg0: i32, %arg1: i32) -> (i32, i32) {
    %c0_i32 = arith.constant 0 : i32
    %c0_i32_0 = arith.constant 0 : i32
    return %arg0, %c0_i32 : i32, i32
  }
  func.func @transform_1(%arg0: i32, %arg1: i32) -> (i32, i32) {
    %c0_i32 = arith.constant 0 : i32
    %c0_i32_0 = arith.constant 0 : i32
    return %c0_i32, %arg1 : i32, i32
  }
  func.func @transform_2(%arg0: i32, %arg1: i32) -> (i32, i32) {
    %c0_i32 = arith.constant 0 : i32
    return %arg0, %arg1 : i32, i32
  }
  func.func @transform_3(%arg0: i32, %arg1: i32) -> (i32, i32, i32) {
    %c0_i32 = arith.constant 0 : i32
    %c0_i32_0 = arith.constant 0 : i32
    return %arg0, %c0_i32, %arg1 : i32, i32, i32
  }
}

module attributes {stable_mosaic.version = 11 : i64} {
  func.func @_conv3x3_bn_stats_kernel(%arg0: i32, %arg1: memref<1x8x8x128xf32, #tpu.memory_space<vmem>>, %arg2: memref<1x128xf32, #tpu.memory_space<vmem>>, %arg3: memref<1x128xf32, #tpu.memory_space<vmem>>, %arg4: memref<1152x128xbf16, #tpu.memory_space<vmem>>, %arg5: memref<1x8x8x128xf32, #tpu.memory_space<vmem>>, %arg6: memref<1x8x128xf32, #tpu.memory_space<vmem>>) attributes {dimension_semantics = [#tpu.dimension_semantics<parallel>], iteration_bounds = array<i64: 2>, scalar_prefetch = 0 : i64, scratch_operands = 0 : i64, tpu.core_type = #tpu.core_type<tc>, window_params = [{transform_indices = @transform_0, window_bounds = array<i64: 1, 8, 8, 128>}, {pipeline_mode = #tpu.pipeline_mode<synchronous>, transform_indices = @transform_1, window_bounds = array<i64: 1, 128>}, {pipeline_mode = #tpu.pipeline_mode<synchronous>, transform_indices = @transform_2, window_bounds = array<i64: 1, 128>}, {pipeline_mode = #tpu.pipeline_mode<synchronous>, transform_indices = @transform_3, window_bounds = array<i64: 1152, 128>}, {transform_indices = @transform_4, window_bounds = array<i64: 1, 8, 8, 128>}, {transform_indices = @transform_5, window_bounds = array<i64: 1, 8, 128>}]} {
    %c0 = arith.constant 0 : index
    %c0_0 = arith.constant 0 : index
    %c0_1 = arith.constant 0 : index
    %c0_2 = arith.constant 0 : index
    %0 = vector.load %arg1[%c0, %c0_0, %c0_1, %c0_2] : memref<1x8x8x128xf32, #tpu.memory_space<vmem>>, vector<1x8x8x128xf32>
    %1 = vector.shape_cast %0 : vector<1x8x8x128xf32> to vector<8x8x128xf32>
    %c0_3 = arith.constant 0 : index
    %c0_4 = arith.constant 0 : index
    %2 = vector.load %arg2[%c0_3, %c0_4] : memref<1x128xf32, #tpu.memory_space<vmem>>, vector<1x128xf32>
    %3 = vector.shape_cast %2 : vector<1x128xf32> to vector<1x1x128xf32>
    %4 = vector.broadcast %3 : vector<1x1x128xf32> to vector<8x8x128xf32>
    %5 = arith.mulf %1, %4 : vector<8x8x128xf32>
    %c0_5 = arith.constant 0 : index
    %c0_6 = arith.constant 0 : index
    %6 = vector.load %arg3[%c0_5, %c0_6] : memref<1x128xf32, #tpu.memory_space<vmem>>, vector<1x128xf32>
    %7 = vector.shape_cast %6 : vector<1x128xf32> to vector<1x1x128xf32>
    %8 = vector.broadcast %7 : vector<1x1x128xf32> to vector<8x8x128xf32>
    %9 = arith.addf %5, %8 : vector<8x8x128xf32>
    %cst = arith.constant 0.000000e+00 : f32
    %10 = vector.broadcast %cst : f32 to vector<8x8x128xf32>
    %11 = arith.maximumf %9, %10 : vector<8x8x128xf32>
    %cst_7 = arith.constant 0.000000e+00 : f32
    %12 = vector.broadcast %cst_7 : f32 to vector<1x8x128xf32>
    %13 = tpu.concatenate %12, %11, %12 in 0 : vector<1x8x128xf32>, vector<8x8x128xf32>, vector<1x8x128xf32> -> vector<10x8x128xf32>
    %cst_8 = arith.constant 0.000000e+00 : f32
    %14 = vector.broadcast %cst_8 : f32 to vector<10x1x128xf32>
    %15 = tpu.concatenate %14, %13, %14 in 1 : vector<10x1x128xf32>, vector<10x8x128xf32>, vector<10x1x128xf32> -> vector<10x10x128xf32>
    %cst_9 = arith.constant 0.000000e+00 : f32
    %16 = vector.broadcast %cst_9 : f32 to vector<64x128xf32>
    %17 = vector.extract_strided_slice %15 {offsets = [0, 0, 0], sizes = [8, 8, 128], strides = [1, 1, 1]} : vector<10x10x128xf32> to vector<8x8x128xf32>
    %18 = vector.shape_cast %17 : vector<8x8x128xf32> to vector<64x128xf32>
    %19 = arith.truncf %18 : vector<64x128xf32> to vector<64x128xbf16>
    %c0_10 = arith.constant 0 : index
    %c0_11 = arith.constant 0 : index
    %20 = vector.load %arg4[%c0_10, %c0_11] : memref<1152x128xbf16, #tpu.memory_space<vmem>>, vector<128x128xbf16>
    %cst_12 = arith.constant dense<0.000000e+00> : vector<64x128xf32>
    %21 = tpu.matmul %19, %20, %cst_12 {dimension_numbers = #tpu.dot_dimension_numbers<[1], [0], [0], [1], [0, 0, 1, 1], [], []>} : vector<64x128xbf16>, vector<128x128xbf16>, vector<64x128xf32> -> vector<64x128xf32>
    %22 = arith.addf %16, %21 : vector<64x128xf32>
    %23 = vector.extract_strided_slice %15 {offsets = [0, 1, 0], sizes = [8, 8, 128], strides = [1, 1, 1]} : vector<10x10x128xf32> to vector<8x8x128xf32>
    %24 = vector.shape_cast %23 : vector<8x8x128xf32> to vector<64x128xf32>
    %25 = arith.truncf %24 : vector<64x128xf32> to vector<64x128xbf16>
    %c128 = arith.constant 128 : index
    %c0_13 = arith.constant 0 : index
    %26 = vector.load %arg4[%c128, %c0_13] : memref<1152x128xbf16, #tpu.memory_space<vmem>>, vector<128x128xbf16>
    %cst_14 = arith.constant dense<0.000000e+00> : vector<64x128xf32>
    %27 = tpu.matmul %25, %26, %cst_14 {dimension_numbers = #tpu.dot_dimension_numbers<[1], [0], [0], [1], [0, 0, 1, 1], [], []>} : vector<64x128xbf16>, vector<128x128xbf16>, vector<64x128xf32> -> vector<64x128xf32>
    %28 = arith.addf %22, %27 : vector<64x128xf32>
    %29 = vector.extract_strided_slice %15 {offsets = [0, 2, 0], sizes = [8, 8, 128], strides = [1, 1, 1]} : vector<10x10x128xf32> to vector<8x8x128xf32>
    %30 = vector.shape_cast %29 : vector<8x8x128xf32> to vector<64x128xf32>
    %31 = arith.truncf %30 : vector<64x128xf32> to vector<64x128xbf16>
    %c256 = arith.constant 256 : index
    %c0_15 = arith.constant 0 : index
    %32 = vector.load %arg4[%c256, %c0_15] : memref<1152x128xbf16, #tpu.memory_space<vmem>>, vector<128x128xbf16>
    %cst_16 = arith.constant dense<0.000000e+00> : vector<64x128xf32>
    %33 = tpu.matmul %31, %32, %cst_16 {dimension_numbers = #tpu.dot_dimension_numbers<[1], [0], [0], [1], [0, 0, 1, 1], [], []>} : vector<64x128xbf16>, vector<128x128xbf16>, vector<64x128xf32> -> vector<64x128xf32>
    %34 = arith.addf %28, %33 : vector<64x128xf32>
    %35 = vector.extract_strided_slice %15 {offsets = [1, 0, 0], sizes = [8, 8, 128], strides = [1, 1, 1]} : vector<10x10x128xf32> to vector<8x8x128xf32>
    %36 = vector.shape_cast %35 : vector<8x8x128xf32> to vector<64x128xf32>
    %37 = arith.truncf %36 : vector<64x128xf32> to vector<64x128xbf16>
    %c384 = arith.constant 384 : index
    %c0_17 = arith.constant 0 : index
    %38 = vector.load %arg4[%c384, %c0_17] : memref<1152x128xbf16, #tpu.memory_space<vmem>>, vector<128x128xbf16>
    %cst_18 = arith.constant dense<0.000000e+00> : vector<64x128xf32>
    %39 = tpu.matmul %37, %38, %cst_18 {dimension_numbers = #tpu.dot_dimension_numbers<[1], [0], [0], [1], [0, 0, 1, 1], [], []>} : vector<64x128xbf16>, vector<128x128xbf16>, vector<64x128xf32> -> vector<64x128xf32>
    %40 = arith.addf %34, %39 : vector<64x128xf32>
    %41 = vector.extract_strided_slice %15 {offsets = [1, 1, 0], sizes = [8, 8, 128], strides = [1, 1, 1]} : vector<10x10x128xf32> to vector<8x8x128xf32>
    %42 = vector.shape_cast %41 : vector<8x8x128xf32> to vector<64x128xf32>
    %43 = arith.truncf %42 : vector<64x128xf32> to vector<64x128xbf16>
    %c512 = arith.constant 512 : index
    %c0_19 = arith.constant 0 : index
    %44 = vector.load %arg4[%c512, %c0_19] : memref<1152x128xbf16, #tpu.memory_space<vmem>>, vector<128x128xbf16>
    %cst_20 = arith.constant dense<0.000000e+00> : vector<64x128xf32>
    %45 = tpu.matmul %43, %44, %cst_20 {dimension_numbers = #tpu.dot_dimension_numbers<[1], [0], [0], [1], [0, 0, 1, 1], [], []>} : vector<64x128xbf16>, vector<128x128xbf16>, vector<64x128xf32> -> vector<64x128xf32>
    %46 = arith.addf %40, %45 : vector<64x128xf32>
    %47 = vector.extract_strided_slice %15 {offsets = [1, 2, 0], sizes = [8, 8, 128], strides = [1, 1, 1]} : vector<10x10x128xf32> to vector<8x8x128xf32>
    %48 = vector.shape_cast %47 : vector<8x8x128xf32> to vector<64x128xf32>
    %49 = arith.truncf %48 : vector<64x128xf32> to vector<64x128xbf16>
    %c640 = arith.constant 640 : index
    %c0_21 = arith.constant 0 : index
    %50 = vector.load %arg4[%c640, %c0_21] : memref<1152x128xbf16, #tpu.memory_space<vmem>>, vector<128x128xbf16>
    %cst_22 = arith.constant dense<0.000000e+00> : vector<64x128xf32>
    %51 = tpu.matmul %49, %50, %cst_22 {dimension_numbers = #tpu.dot_dimension_numbers<[1], [0], [0], [1], [0, 0, 1, 1], [], []>} : vector<64x128xbf16>, vector<128x128xbf16>, vector<64x128xf32> -> vector<64x128xf32>
    %52 = arith.addf %46, %51 : vector<64x128xf32>
    %53 = vector.extract_strided_slice %15 {offsets = [2, 0, 0], sizes = [8, 8, 128], strides = [1, 1, 1]} : vector<10x10x128xf32> to vector<8x8x128xf32>
    %54 = vector.shape_cast %53 : vector<8x8x128xf32> to vector<64x128xf32>
    %55 = arith.truncf %54 : vector<64x128xf32> to vector<64x128xbf16>
    %c768 = arith.constant 768 : index
    %c0_23 = arith.constant 0 : index
    %56 = vector.load %arg4[%c768, %c0_23] : memref<1152x128xbf16, #tpu.memory_space<vmem>>, vector<128x128xbf16>
    %cst_24 = arith.constant dense<0.000000e+00> : vector<64x128xf32>
    %57 = tpu.matmul %55, %56, %cst_24 {dimension_numbers = #tpu.dot_dimension_numbers<[1], [0], [0], [1], [0, 0, 1, 1], [], []>} : vector<64x128xbf16>, vector<128x128xbf16>, vector<64x128xf32> -> vector<64x128xf32>
    %58 = arith.addf %52, %57 : vector<64x128xf32>
    %59 = vector.extract_strided_slice %15 {offsets = [2, 1, 0], sizes = [8, 8, 128], strides = [1, 1, 1]} : vector<10x10x128xf32> to vector<8x8x128xf32>
    %60 = vector.shape_cast %59 : vector<8x8x128xf32> to vector<64x128xf32>
    %61 = arith.truncf %60 : vector<64x128xf32> to vector<64x128xbf16>
    %c896 = arith.constant 896 : index
    %c0_25 = arith.constant 0 : index
    %62 = vector.load %arg4[%c896, %c0_25] : memref<1152x128xbf16, #tpu.memory_space<vmem>>, vector<128x128xbf16>
    %cst_26 = arith.constant dense<0.000000e+00> : vector<64x128xf32>
    %63 = tpu.matmul %61, %62, %cst_26 {dimension_numbers = #tpu.dot_dimension_numbers<[1], [0], [0], [1], [0, 0, 1, 1], [], []>} : vector<64x128xbf16>, vector<128x128xbf16>, vector<64x128xf32> -> vector<64x128xf32>
    %64 = arith.addf %58, %63 : vector<64x128xf32>
    %65 = vector.extract_strided_slice %15 {offsets = [2, 2, 0], sizes = [8, 8, 128], strides = [1, 1, 1]} : vector<10x10x128xf32> to vector<8x8x128xf32>
    %66 = vector.shape_cast %65 : vector<8x8x128xf32> to vector<64x128xf32>
    %67 = arith.truncf %66 : vector<64x128xf32> to vector<64x128xbf16>
    %c1024 = arith.constant 1024 : index
    %c0_27 = arith.constant 0 : index
    %68 = vector.load %arg4[%c1024, %c0_27] : memref<1152x128xbf16, #tpu.memory_space<vmem>>, vector<128x128xbf16>
    %cst_28 = arith.constant dense<0.000000e+00> : vector<64x128xf32>
    %69 = tpu.matmul %67, %68, %cst_28 {dimension_numbers = #tpu.dot_dimension_numbers<[1], [0], [0], [1], [0, 0, 1, 1], [], []>} : vector<64x128xbf16>, vector<128x128xbf16>, vector<64x128xf32> -> vector<64x128xf32>
    %70 = arith.addf %64, %69 : vector<64x128xf32>
    %71 = vector.shape_cast %70 : vector<64x128xf32> to vector<8x8x128xf32>
    %c0_29 = arith.constant 0 : index
    %c0_30 = arith.constant 0 : index
    %c0_31 = arith.constant 0 : index
    %c0_32 = arith.constant 0 : index
    %72 = vector.load %arg5[%c0_29, %c0_30, %c0_31, %c0_32] : memref<1x8x8x128xf32, #tpu.memory_space<vmem>>, vector<1x8x8x128xf32>
    %73 = vector.shape_cast %72 : vector<1x8x8x128xf32> to vector<8x8x128xf32>
    %74 = vector.shape_cast %71 : vector<8x8x128xf32> to vector<1x8x8x128xf32>
    tpu.vector_store %arg5[%c0_29, %c0_30, %c0_31, %c0_32], %74 {strides = array<i32>} : memref<1x8x8x128xf32, #tpu.memory_space<vmem>>, vector<1x8x8x128xf32>,
    %cst_33 = arith.constant dense<0.000000e+00> : vector<128xf32>
    %75 = vector.multi_reduction <add>, %70, %cst_33 [0] : vector<64x128xf32> to vector<128xf32>
    %76 = vector.shape_cast %75 : vector<128xf32> to vector<1x128xf32>
    %77 = arith.mulf %70, %70 : vector<64x128xf32>
    %cst_34 = arith.constant dense<0.000000e+00> : vector<128xf32>
    %78 = vector.multi_reduction <add>, %77, %cst_34 [0] : vector<64x128xf32> to vector<128xf32>
    %79 = vector.shape_cast %78 : vector<128xf32> to vector<1x128xf32>
    %cst_35 = arith.constant 0.000000e+00 : f32
    %80 = vector.broadcast %cst_35 : f32 to vector<6x128xf32>
    %81 = tpu.concatenate %76, %79, %80 in 0 : vector<1x128xf32>, vector<1x128xf32>, vector<6x128xf32> -> vector<8x128xf32>
    %c0_36 = arith.constant 0 : index
    %c0_37 = arith.constant 0 : index
    %c0_38 = arith.constant 0 : index
    %82 = vector.load %arg6[%c0_36, %c0_37, %c0_38] : memref<1x8x128xf32, #tpu.memory_space<vmem>>, vector<1x8x128xf32>
    %83 = vector.shape_cast %82 : vector<1x8x128xf32> to vector<8x128xf32>
    %84 = vector.shape_cast %81 : vector<8x128xf32> to vector<1x8x128xf32>
    tpu.vector_store %arg6[%c0_36, %c0_37, %c0_38], %84 {strides = array<i32>} : memref<1x8x128xf32, #tpu.memory_space<vmem>>, vector<1x8x128xf32>,
    return
  }
  func.func @transform_0(%arg0: i32) -> (i32, i32, i32, i32) {
    %c0_i32 = arith.constant 0 : i32
    %c0_i32_0 = arith.constant 0 : i32
    %c0_i32_1 = arith.constant 0 : i32
    %c0_i32_2 = arith.constant 0 : i32
    return %arg0, %c0_i32, %c0_i32_0, %c0_i32_1 : i32, i32, i32, i32
  }
  func.func @transform_1(%arg0: i32) -> (i32, i32) {
    %c0_i32 = arith.constant 0 : i32
    %c0_i32_0 = arith.constant 0 : i32
    %c0_i32_1 = arith.constant 0 : i32
    return %c0_i32, %c0_i32_0 : i32, i32
  }
  func.func @transform_2(%arg0: i32) -> (i32, i32) {
    %c0_i32 = arith.constant 0 : i32
    %c0_i32_0 = arith.constant 0 : i32
    %c0_i32_1 = arith.constant 0 : i32
    return %c0_i32, %c0_i32_0 : i32, i32
  }
  func.func @transform_3(%arg0: i32) -> (i32, i32) {
    %c0_i32 = arith.constant 0 : i32
    %c0_i32_0 = arith.constant 0 : i32
    %c0_i32_1 = arith.constant 0 : i32
    return %c0_i32, %c0_i32_0 : i32, i32
  }
  func.func @transform_4(%arg0: i32) -> (i32, i32, i32, i32) {
    %c0_i32 = arith.constant 0 : i32
    %c0_i32_0 = arith.constant 0 : i32
    %c0_i32_1 = arith.constant 0 : i32
    %c0_i32_2 = arith.constant 0 : i32
    return %arg0, %c0_i32, %c0_i32_0, %c0_i32_1 : i32, i32, i32, i32
  }
  func.func @transform_5(%arg0: i32) -> (i32, i32, i32) {
    %c0_i32 = arith.constant 0 : i32
    %c0_i32_0 = arith.constant 0 : i32
    %c0_i32_1 = arith.constant 0 : i32
    return %arg0, %c0_i32, %c0_i32_0 : i32, i32, i32
  }
}

module attributes {stable_mosaic.version = 11 : i64} {
  func.func @_bn_mm_stats_kernel(%arg0: i32, %arg1: i32, %arg2: memref<128x128xf32, #tpu.memory_space<vmem>>, %arg3: memref<1x128xf32, #tpu.memory_space<vmem>>, %arg4: memref<1x128xf32, #tpu.memory_space<vmem>>, %arg5: memref<128x128xbf16, #tpu.memory_space<vmem>>, %arg6: memref<128x128xf32, #tpu.memory_space<vmem>>, %arg7: memref<1x8x128xf32, #tpu.memory_space<vmem>>) attributes {dimension_semantics = [#tpu.dimension_semantics<parallel>, #tpu.dimension_semantics<parallel>], iteration_bounds = array<i64: 1, 1>, scalar_prefetch = 0 : i64, scratch_operands = 0 : i64, tpu.core_type = #tpu.core_type<tc>, window_params = [{transform_indices = @transform_0, window_bounds = array<i64: 128, 128>}, {pipeline_mode = #tpu.pipeline_mode<synchronous>, transform_indices = @transform_1, window_bounds = array<i64: 1, 128>}, {pipeline_mode = #tpu.pipeline_mode<synchronous>, transform_indices = @transform_2, window_bounds = array<i64: 1, 128>}, {transform_indices = @transform_3, window_bounds = array<i64: 128, 128>}, {transform_indices = @transform_4, window_bounds = array<i64: 128, 128>}, {transform_indices = @transform_5, window_bounds = array<i64: 1, 8, 128>}]} {
    %c0 = arith.constant 0 : index
    %c0_0 = arith.constant 0 : index
    %0 = vector.load %arg2[%c0, %c0_0] : memref<128x128xf32, #tpu.memory_space<vmem>>, vector<128x128xf32>
    %c0_1 = arith.constant 0 : index
    %c0_2 = arith.constant 0 : index
    %1 = vector.load %arg3[%c0_1, %c0_2] : memref<1x128xf32, #tpu.memory_space<vmem>>, vector<1x128xf32>
    %2 = vector.broadcast %1 : vector<1x128xf32> to vector<128x128xf32>
    %3 = arith.mulf %0, %2 : vector<128x128xf32>
    %c0_3 = arith.constant 0 : index
    %c0_4 = arith.constant 0 : index
    %4 = vector.load %arg4[%c0_3, %c0_4] : memref<1x128xf32, #tpu.memory_space<vmem>>, vector<1x128xf32>
    %5 = vector.broadcast %4 : vector<1x128xf32> to vector<128x128xf32>
    %6 = arith.addf %3, %5 : vector<128x128xf32>
    %cst = arith.constant 0.000000e+00 : f32
    %7 = vector.broadcast %cst : f32 to vector<128x128xf32>
    %8 = arith.maximumf %6, %7 : vector<128x128xf32>
    %9 = arith.truncf %8 : vector<128x128xf32> to vector<128x128xbf16>
    %c0_5 = arith.constant 0 : index
    %c0_6 = arith.constant 0 : index
    %10 = vector.load %arg5[%c0_5, %c0_6] : memref<128x128xbf16, #tpu.memory_space<vmem>>, vector<128x128xbf16>
    %cst_7 = arith.constant dense<0.000000e+00> : vector<128x128xf32>
    %11 = tpu.matmul %9, %10, %cst_7 {dimension_numbers = #tpu.dot_dimension_numbers<[1], [0], [0], [1], [0, 0, 1, 1], [], []>} : vector<128x128xbf16>, vector<128x128xbf16>, vector<128x128xf32> -> vector<128x128xf32>
    %c0_8 = arith.constant 0 : index
    %c0_9 = arith.constant 0 : index
    %12 = vector.load %arg6[%c0_8, %c0_9] : memref<128x128xf32, #tpu.memory_space<vmem>>, vector<128x128xf32>
    tpu.vector_store %arg6[%c0_8, %c0_9], %11 {strides = array<i32>} : memref<128x128xf32, #tpu.memory_space<vmem>>, vector<128x128xf32>,
    %cst_10 = arith.constant dense<0.000000e+00> : vector<128xf32>
    %13 = vector.multi_reduction <add>, %11, %cst_10 [0] : vector<128x128xf32> to vector<128xf32>
    %14 = vector.shape_cast %13 : vector<128xf32> to vector<1x128xf32>
    %15 = arith.mulf %11, %11 : vector<128x128xf32>
    %cst_11 = arith.constant dense<0.000000e+00> : vector<128xf32>
    %16 = vector.multi_reduction <add>, %15, %cst_11 [0] : vector<128x128xf32> to vector<128xf32>
    %17 = vector.shape_cast %16 : vector<128xf32> to vector<1x128xf32>
    %cst_12 = arith.constant 0.000000e+00 : f32
    %18 = vector.broadcast %cst_12 : f32 to vector<6x128xf32>
    %19 = tpu.concatenate %14, %17, %18 in 0 : vector<1x128xf32>, vector<1x128xf32>, vector<6x128xf32> -> vector<8x128xf32>
    %c0_13 = arith.constant 0 : index
    %c0_14 = arith.constant 0 : index
    %c0_15 = arith.constant 0 : index
    %20 = vector.load %arg7[%c0_13, %c0_14, %c0_15] : memref<1x8x128xf32, #tpu.memory_space<vmem>>, vector<1x8x128xf32>
    %21 = vector.shape_cast %20 : vector<1x8x128xf32> to vector<8x128xf32>
    %22 = vector.shape_cast %19 : vector<8x128xf32> to vector<1x8x128xf32>
    tpu.vector_store %arg7[%c0_13, %c0_14, %c0_15], %22 {strides = array<i32>} : memref<1x8x128xf32, #tpu.memory_space<vmem>>, vector<1x8x128xf32>,
    return
  }
  func.func @transform_0(%arg0: i32, %arg1: i32) -> (i32, i32) {
    %c0_i32 = arith.constant 0 : i32
    %c0_i32_0 = arith.constant 0 : i32
    return %arg0, %c0_i32 : i32, i32
  }
  func.func @transform_1(%arg0: i32, %arg1: i32) -> (i32, i32) {
    %c0_i32 = arith.constant 0 : i32
    %c0_i32_0 = arith.constant 0 : i32
    %c0_i32_1 = arith.constant 0 : i32
    return %c0_i32, %c0_i32_0 : i32, i32
  }
  func.func @transform_2(%arg0: i32, %arg1: i32) -> (i32, i32) {
    %c0_i32 = arith.constant 0 : i32
    %c0_i32_0 = arith.constant 0 : i32
    %c0_i32_1 = arith.constant 0 : i32
    return %c0_i32, %c0_i32_0 : i32, i32
  }
  func.func @transform_3(%arg0: i32, %arg1: i32) -> (i32, i32) {
    %c0_i32 = arith.constant 0 : i32
    %c0_i32_0 = arith.constant 0 : i32
    return %c0_i32, %arg1 : i32, i32
  }
  func.func @transform_4(%arg0: i32, %arg1: i32) -> (i32, i32) {
    %c0_i32 = arith.constant 0 : i32
    return %arg0, %arg1 : i32, i32
  }
  func.func @transform_5(%arg0: i32, %arg1: i32) -> (i32, i32, i32) {
    %c0_i32 = arith.constant 0 : i32
    %c0_i32_0 = arith.constant 0 : i32
    return %arg0, %c0_i32, %arg1 : i32, i32, i32
  }
}

module attributes {stable_mosaic.version = 11 : i64} {
  func.func @_bn_res_relu_kernel(%arg0: i32, %arg1: i32, %arg2: memref<128x128xf32, #tpu.memory_space<vmem>>, %arg3: memref<128x128xf32, #tpu.memory_space<vmem>>, %arg4: memref<1x128xf32, #tpu.memory_space<vmem>>, %arg5: memref<1x128xf32, #tpu.memory_space<vmem>>, %arg6: memref<128x128xf32, #tpu.memory_space<vmem>>) attributes {dimension_semantics = [#tpu.dimension_semantics<parallel>, #tpu.dimension_semantics<parallel>], iteration_bounds = array<i64: 1, 1>, scalar_prefetch = 0 : i64, scratch_operands = 0 : i64, tpu.core_type = #tpu.core_type<tc>, window_params = [{transform_indices = @transform_0, window_bounds = array<i64: 128, 128>}, {transform_indices = @transform_1, window_bounds = array<i64: 128, 128>}, {transform_indices = @transform_2, window_bounds = array<i64: 1, 128>}, {transform_indices = @transform_3, window_bounds = array<i64: 1, 128>}, {transform_indices = @transform_4, window_bounds = array<i64: 128, 128>}]} {
    %c0 = arith.constant 0 : index
    %c0_0 = arith.constant 0 : index
    %0 = vector.load %arg2[%c0, %c0_0] : memref<128x128xf32, #tpu.memory_space<vmem>>, vector<128x128xf32>
    %c0_1 = arith.constant 0 : index
    %c0_2 = arith.constant 0 : index
    %1 = vector.load %arg4[%c0_1, %c0_2] : memref<1x128xf32, #tpu.memory_space<vmem>>, vector<1x128xf32>
    %2 = vector.broadcast %1 : vector<1x128xf32> to vector<128x128xf32>
    %3 = arith.mulf %0, %2 : vector<128x128xf32>
    %c0_3 = arith.constant 0 : index
    %c0_4 = arith.constant 0 : index
    %4 = vector.load %arg5[%c0_3, %c0_4] : memref<1x128xf32, #tpu.memory_space<vmem>>, vector<1x128xf32>
    %5 = vector.broadcast %4 : vector<1x128xf32> to vector<128x128xf32>
    %6 = arith.addf %3, %5 : vector<128x128xf32>
    %c0_5 = arith.constant 0 : index
    %c0_6 = arith.constant 0 : index
    %7 = vector.load %arg3[%c0_5, %c0_6] : memref<128x128xf32, #tpu.memory_space<vmem>>, vector<128x128xf32>
    %8 = arith.addf %6, %7 : vector<128x128xf32>
    %cst = arith.constant 0.000000e+00 : f32
    %9 = vector.broadcast %cst : f32 to vector<128x128xf32>
    %10 = arith.maximumf %8, %9 : vector<128x128xf32>
    %c0_7 = arith.constant 0 : index
    %c0_8 = arith.constant 0 : index
    %11 = vector.load %arg6[%c0_7, %c0_8] : memref<128x128xf32, #tpu.memory_space<vmem>>, vector<128x128xf32>
    tpu.vector_store %arg6[%c0_7, %c0_8], %10 {strides = array<i32>} : memref<128x128xf32, #tpu.memory_space<vmem>>, vector<128x128xf32>,
    return
  }
  func.func @transform_0(%arg0: i32, %arg1: i32) -> (i32, i32) {
    %c0_i32 = arith.constant 0 : i32
    return %arg0, %arg1 : i32, i32
  }
  func.func @transform_1(%arg0: i32, %arg1: i32) -> (i32, i32) {
    %c0_i32 = arith.constant 0 : i32
    return %arg0, %arg1 : i32, i32
  }
  func.func @transform_2(%arg0: i32, %arg1: i32) -> (i32, i32) {
    %c0_i32 = arith.constant 0 : i32
    %c0_i32_0 = arith.constant 0 : i32
    return %c0_i32, %arg1 : i32, i32
  }
  func.func @transform_3(%arg0: i32, %arg1: i32) -> (i32, i32) {
    %c0_i32 = arith.constant 0 : i32
    %c0_i32_0 = arith.constant 0 : i32
    return %c0_i32, %arg1 : i32, i32
  }
  func.func @transform_4(%arg0: i32, %arg1: i32) -> (i32, i32) {
    %c0_i32 = arith.constant 0 : i32
    return %arg0, %arg1 : i32, i32
  }
}

</mosaic_0001>

<llo_original>
// kernel: bottleneck_forward.6
$region0: #{bottleneck_forward.6}
  #allocation0 [shape = 'u32[]', space=smem, size = 0x4, offset = 0x4, fixed_abs, tag = 'smem constant byte address 0x4 - core index']
  #allocation1 [shape = 'u32[72,128]{1,0:T(1,128)}', space=vmem, size = 0x9000, scoped, tag = 'internal scratch']
  %s0 = inlined_call_operand.vmem [shape: f32[128,128], index: 0, kind: input, shape index: {}]
  %s1 = inlined_call_operand.vmem [shape: f32[1,128], index: 1, kind: input, shape index: {}]
  %s2 = inlined_call_operand.vmem [shape: f32[1,128], index: 2, kind: input, shape index: {}]
  %s3 = inlined_call_operand.vmem [shape: bf16[128,128], index: 3, kind: input, shape index: {}]
  %s4 = inlined_call_operand.vmem [shape: f32[128,128], index: 4, kind: output, shape index: {0}]
  %s5 = inlined_call_operand.vmem [shape: f32[1,8,128], index: 5, kind: output, shape index: {1}]
  %6 = xla_tuple %s4, %s5
  %s7 = sld [smem:[#allocation0]]
  $region34: #{bottleneck_forward.6} parent=0
    _
  %s9 = ssub.s32 1, %s7
  %s10 = scalar_select 0, %s9, %s7
  // Predicated region
  $region2: #{bottleneck_forward.6} parent=0 // pred_check
    _
  $region3: #{bottleneck_forward.6} parent=0 // pred_check_branch
    %12 = sbr.rel (0) target = $region5
  $region4: #{bottleneck_forward.6} parent=0 // pred_region
    _
  $region5: #{bottleneck_forward.6} parent=0 // pred_fallthru
    _
  // Predicated region
  $region6: #{bottleneck_forward.6} parent=0 // pred_check
    _
  $region7: #{bottleneck_forward.6} parent=0 // pred_check_branch
    %14 = sbr.rel (0) target = $region9
  $region8: #{bottleneck_forward.6} parent=0 // pred_region
    _
  $region9: #{bottleneck_forward.6} parent=0 // pred_fallthru
    _
  // Predicated region
  $region10: #{bottleneck_forward.6} parent=0 // pred_check
    _
  $region11: #{bottleneck_forward.6} parent=0 // pred_check_branch
    %16 = sbr.rel (0) target = $region13
  $region12: #{bottleneck_forward.6} parent=0 // pred_region
    _
  $region13: #{bottleneck_forward.6} parent=0 // pred_fallthru
    _
  // Predicated region
  $region14: #{bottleneck_forward.6} parent=0 // pred_check
    _
  $region15: #{bottleneck_forward.6} parent=0 // pred_check_branch
    %18 = sbr.rel (0) target = $region17
  $region16: #{bottleneck_forward.6} parent=0 // pred_region
    _
  $region17: #{bottleneck_forward.6} parent=0 // pred_fallthru
    _
  %v19 = vld [vmem:[%s0] sm:$0xff]
  %v20 = vld [vmem:[%s0 + $0x8] sm:$0xff]
  %v21 = vld [vmem:[%s0 + $0x10] sm:$0xff]
  %v22 = vld [vmem:[%s0 + $0x18] sm:$0xff]
  %v23 = vld [vmem:[%s0 + $0x20] sm:$0xff]
  %v24 = vld [vmem:[%s0 + $0x28] sm:$0xff]
  %v25 = vld [vmem:[%s0 + $0x30] sm:$0xff]
  %v26 = vld [vmem:[%s0 + $0x38] sm:$0xff]
  %v27 = vld [vmem:[%s0 + $0x40] sm:$0xff]
  %v28 = vld [vmem:[%s0 + $0x48] sm:$0xff]
  %v29 = vld [vmem:[%s0 + $0x50] sm:$0xff]
  %v30 = vld [vmem:[%s0 + $0x58] sm:$0xff]
  %v31 = vld [vmem:[%s0 + $0x60] sm:$0xff]
  %v32 = vld [vmem:[%s0 + $0x68] sm:$0xff]
  %v33 = vld [vmem:[%s0 + $0x70] sm:$0xff]
  %v34 = vld [vmem:[%s0 + $0x78] sm:$0xff]
  %v35 = vld [vmem:[%s1] sm:$0x1]
  %v37 = vperm.slane %v35, 0
  %v39 = vmul.f32 %v19, %v37
  %v40 = vmul.f32 %v20, %v37
  %v41 = vmul.f32 %v21, %v37
  %v42 = vmul.f32 %v22, %v37
  %v43 = vmul.f32 %v23, %v37
  %v44 = vmul.f32 %v24, %v37
  %v45 = vmul.f32 %v25, %v37
  %v46 = vmul.f32 %v26, %v37
  %v47 = vmul.f32 %v27, %v37
  %v48 = vmul.f32 %v28, %v37
  %v49 = vmul.f32 %v29, %v37
  %v50 = vmul.f32 %v30, %v37
  %v51 = vmul.f32 %v31, %v37
  %v52 = vmul.f32 %v32, %v37
  %v53 = vmul.f32 %v33, %v37
  %v54 = vmul.f32 %v34, %v37
  %v55 = vld [vmem:[%s2] sm:$0x1]
  %v57 = vperm.slane %v55, 0
  %v59 = vadd.f32 %v39, %v57
  %v60 = vadd.f32 %v40, %v57
  %v61 = vadd.f32 %v41, %v57
  %v62 = vadd.f32 %v42, %v57
  %v63 = vadd.f32 %v43, %v57
  %v64 = vadd.f32 %v44, %v57
  %v65 = vadd.f32 %v45, %v57
  %v66 = vadd.f32 %v46, %v57
  %v67 = vadd.f32 %v47, %v57
  %v68 = vadd.f32 %v48, %v57
  %v69 = vadd.f32 %v49, %v57
  %v70 = vadd.f32 %v50, %v57
  %v71 = vadd.f32 %v51, %v57
  %v72 = vadd.f32 %v52, %v57
  %v73 = vadd.f32 %v53, %v57
  %v74 = vadd.f32 %v54, %v57
  %v75 = vmax.f32 %v59, 0.0
  %v76 = vmax.f32 %v60, 0.0
  %v77 = vmax.f32 %v61, 0.0
  %v78 = vmax.f32 %v62, 0.0
  %v79 = vmax.f32 %v63, 0.0
  %v80 = vmax.f32 %v64, 0.0
  %v81 = vmax.f32 %v65, 0.0
  %v82 = vmax.f32 %v66, 0.0
  %v83 = vmax.f32 %v67, 0.0
  %v84 = vmax.f32 %v68, 0.0
  %v85 = vmax.f32 %v69, 0.0
  %v86 = vmax.f32 %v70, 0.0
  %v87 = vmax.f32 %v71, 0.0
  %v88 = vmax.f32 %v72, 0.0
  %v89 = vmax.f32 %v73, 0.0
  %v90 = vmax.f32 %v74, 0.0
  %v91 = vpack.c.bf16 %v76, %v75
  %v92 = vpack.c.bf16 %v78, %v77
  %v93 = vpack.c.bf16 %v80, %v79
  %v94 = vpack.c.bf16 %v82, %v81
  %v95 = vpack.c.bf16 %v84, %v83
  %v96 = vpack.c.bf16 %v86, %v85
  %v97 = vpack.c.bf16 %v88, %v87
  %v98 = vpack.c.bf16 %v90, %v89
  %v99 = vld [vmem:[%s3] sm:$0xf]
  %v100 = vld [vmem:[%s3 + $0x4] sm:$0xf]
  %v101 = vld [vmem:[%s3 + $0x8] sm:$0xf]
  %v102 = vld [vmem:[%s3 + $0xc] sm:$0xf]
  %v103 = vld [vmem:[%s3 + $0x10] sm:$0xf]
  %v104 = vld [vmem:[%s3 + $0x14] sm:$0xf]
  %v105 = vld [vmem:[%s3 + $0x18] sm:$0xf]
  %v106 = vld [vmem:[%s3 + $0x1c] sm:$0xf]
  %v107 = vld [vmem:[%s3 + $0x20] sm:$0xf]
  %v108 = vld [vmem:[%s3 + $0x24] sm:$0xf]
  %v109 = vld [vmem:[%s3 + $0x28] sm:$0xf]
  %v110 = vld [vmem:[%s3 + $0x2c] sm:$0xf]
  %v111 = vld [vmem:[%s3 + $0x30] sm:$0xf]
  %v112 = vld [vmem:[%s3 + $0x34] sm:$0xf]
  %v113 = vld [vmem:[%s3 + $0x38] sm:$0xf]
  %v114 = vld [vmem:[%s3 + $0x3c] sm:$0xf]
  %v131 = vunpack.c.l.b16 %v99
  %v132 = vunpack.c.l.b16 %v100
  %v133 = vunpack.c.l.b16 %v101
  %v134 = vunpack.c.l.b16 %v102
  %v135 = vunpack.c.l.b16 %v103
  %v136 = vunpack.c.l.b16 %v104
  %v137 = vunpack.c.l.b16 %v105
  %v138 = vunpack.c.l.b16 %v106
  %v139 = vunpack.c.l.b16 %v107
  %v140 = vunpack.c.l.b16 %v108
  %v141 = vunpack.c.l.b16 %v109
  %v142 = vunpack.c.l.b16 %v110
  %v143 = vunpack.c.l.b16 %v111
  %v144 = vunpack.c.l.b16 %v112
  %v145 = vunpack.c.l.b16 %v113
  %v146 = vunpack.c.l.b16 %v114
  %v147 = vpack.c.b16 %v132, %v131
  %v148 = vpack.c.b16 %v134, %v133
  %v149 = vpack.c.b16 %v136, %v135
  %v150 = vpack.c.b16 %v138, %v137
  %v151 = vpack.c.b16 %v140, %v139
  %v152 = vpack.c.b16 %v142, %v141
  %v153 = vpack.c.b16 %v144, %v143
  %v154 = vpack.c.b16 %v146, %v145
  %163 = vmatpush.bf16.msra.mxu0 %v154
  %164 = vmatpush.bf16.msra.mxu0 %v153
  %165 = vmatpush.bf16.msra.mxu0 %v152
  %166 = vmatpush.bf16.msra.mxu0 %v151
  %167 = vmatpush.bf16.msra.mxu0 %v150
  %168 = vmatpush.bf16.msra.mxu0 %v149
  %169 = vmatpush.bf16.msra.mxu0 %v148
  %170 = vmatpush.bf16.msra.mxu0 %v147
  %171 = vmatmul.bf16.gmra.mxu0 %v91
  %v172 = vpop.f32.mrf.mxu0
  %v173 = vadd.f32 0.0, %v172
  %v174 = vpop.f32.mrf.mxu0
  %v175 = vadd.f32 0.0, %v174
  %176 = vmatmul.bf16.gmra.mxu0 %v92
  %v177 = vpop.f32.mrf.mxu0
  %v178 = vadd.f32 0.0, %v177
  %v179 = vpop.f32.mrf.mxu0
  %v180 = vadd.f32 0.0, %v179
  %181 = vmatmul.bf16.gmra.mxu0 %v93
  %v182 = vpop.f32.mrf.mxu0
  %v183 = vadd.f32 0.0, %v182
  %v184 = vpop.f32.mrf.mxu0
  %v185 = vadd.f32 0.0, %v184
  %186 = vmatmul.bf16.gmra.mxu0 %v94
  %v187 = vpop.f32.mrf.mxu0
  %v188 = vadd.f32 0.0, %v187
  %v189 = vpop.f32.mrf.mxu0
  %v190 = vadd.f32 0.0, %v189
  %191 = vmatmul.bf16.gmra.mxu0 %v95
  %v192 = vpop.f32.mrf.mxu0
  %v193 = vadd.f32 0.0, %v192
  %v194 = vpop.f32.mrf.mxu0
  %v195 = vadd.f32 0.0, %v194
  %196 = vmatmul.bf16.gmra.mxu0 %v96
  %v197 = vpop.f32.mrf.mxu0
  %v198 = vadd.f32 0.0, %v197
  %v199 = vpop.f32.mrf.mxu0
  %v200 = vadd.f32 0.0, %v199
  %201 = vmatmul.bf16.gmra.mxu0 %v97
  %v202 = vpop.f32.mrf.mxu0
  %v203 = vadd.f32 0.0, %v202
  %v204 = vpop.f32.mrf.mxu0
  %v205 = vadd.f32 0.0, %v204
  %206 = vmatmul.bf16.gmra.mxu0 %v98
  %v207 = vpop.f32.mrf.mxu0
  %v208 = vadd.f32 0.0, %v207
  %v209 = vpop.f32.mrf.mxu0
  %v210 = vadd.f32 0.0, %v209
  %211 = vdwg.mxu0
  %212 = vst [vmem:[%s4] sm:$0xff] %v173
  %213 = vst [vmem:[%s4 + $0x8] sm:$0xff] %v175
  %214 = vst [vmem:[%s4 + $0x10] sm:$0xff] %v178
  %215 = vst [vmem:[%s4 + $0x18] sm:$0xff] %v180
  %216 = vst [vmem:[%s4 + $0x20] sm:$0xff] %v183
  %217 = vst [vmem:[%s4 + $0x28] sm:$0xff] %v185
  %218 = vst [vmem:[%s4 + $0x30] sm:$0xff] %v188
  %219 = vst [vmem:[%s4 + $0x38] sm:$0xff] %v190
  %220 = vst [vmem:[%s4 + $0x40] sm:$0xff] %v193
  %221 = vst [vmem:[%s4 + $0x48] sm:$0xff] %v195
  %222 = vst [vmem:[%s4 + $0x50] sm:$0xff] %v198
  %223 = vst [vmem:[%s4 + $0x58] sm:$0xff] %v200
  %224 = vst [vmem:[%s4 + $0x60] sm:$0xff] %v203
  %225 = vst [vmem:[%s4 + $0x68] sm:$0xff] %v205
  %226 = vst [vmem:[%s4 + $0x70] sm:$0xff] %v208
  %227 = vst [vmem:[%s4 + $0x78] sm:$0xff] %v210
  %v228 = vadd.f32 %v173, %v175
  %v229 = vadd.f32 %v228, %v178
  %v230 = vadd.f32 %v229, %v180
  %v231 = vadd.f32 %v230, %v183
  %v232 = vadd.f32 %v231, %v185
  %v233 = vadd.f32 %v232, %v188
  %v234 = vadd.f32 %v233, %v190
  %v235 = vadd.f32 %v234, %v193
  %v236 = vadd.f32 %v235, %v195
  %v237 = vadd.f32 %v236, %v198
  %v238 = vadd.f32 %v237, %v200
  %v239 = vadd.f32 %v238, %v203
  %v240 = vadd.f32 %v239, %v205
  %v241 = vadd.f32 %v240, %v208
  %v242 = vadd.f32 %v241, %v210
  %v243 = vrot.slane %v242, 4
  %v244 = vadd.f32 %v242, %v243
  %v245 = vrot.slane %v244, 2
  %v246 = vadd.f32 %v244, %v245
  %v247 = vrot.slane %v246, 1
  %v248 = vadd.f32 %v246, %v247
  %v249 = vmul.f32 %v173, %v173
  %v250 = vmul.f32 %v175, %v175
  %v251 = vmul.f32 %v178, %v178
  %v252 = vmul.f32 %v180, %v180
  %v253 = vmul.f32 %v183, %v183
  %v254 = vmul.f32 %v185, %v185
  %v255 = vmul.f32 %v188, %v188
  %v256 = vmul.f32 %v190, %v190
  %v257 = vmul.f32 %v193, %v193
  %v258 = vmul.f32 %v195, %v195
  %v259 = vmul.f32 %v198, %v198
  %v260 = vmul.f32 %v200, %v200
  %v261 = vmul.f32 %v203, %v203
  %v262 = vmul.f32 %v205, %v205
  %v263 = vmul.f32 %v208, %v208
  %v264 = vmul.f32 %v210, %v210
  %v265 = vadd.f32 %v249, %v250
  %v266 = vadd.f32 %v265, %v251
  %v267 = vadd.f32 %v266, %v252
  %v268 = vadd.f32 %v267, %v253
  %v269 = vadd.f32 %v268, %v254
  %v270 = vadd.f32 %v269, %v255
  %v271 = vadd.f32 %v270, %v256
  %v272 = vadd.f32 %v271, %v257
  %v273 = vadd.f32 %v272, %v258
  %v274 = vadd.f32 %v273, %v259
  %v275 = vadd.f32 %v274, %v260
  %v276 = vadd.f32 %v275, %v261
  %v277 = vadd.f32 %v276, %v262
  %v278 = vadd.f32 %v277, %v263
  %v279 = vadd.f32 %v278, %v264
  %v280 = vrot.slane %v279, 4
  %v281 = vadd.f32 %v279, %v280
  %v282 = vrot.slane %v281, 2
  %v283 = vadd.f32 %v281, %v282
  %v284 = vrot.slane %v283, 1
  %v285 = vadd.f32 %v283, %v284
  %vm286 = vcmask 1040384
  %v287 = vsel %vm286, %v248, %v285
  %vm288 = vcmask 1041408
  %v289 = vsel %vm288, %v287, 0.0
  %290 = vst [vmem:[%s5] sm:$0xff] %v289
  // Predicated region
  $region18: #{bottleneck_forward.6} parent=0 // pred_check
    _
  $region19: #{bottleneck_forward.6} parent=0 // pred_check_branch
    %292 = sbr.rel (0) target = $region21
  $region20: #{bottleneck_forward.6} parent=0 // pred_region
    _
  $region21: #{bottleneck_forward.6} parent=0 // pred_fallthru
    _
  // Predicated region
  $region22: #{bottleneck_forward.6} parent=0 // pred_check
    _
  $region23: #{bottleneck_forward.6} parent=0 // pred_check_branch
    %294 = sbr.rel (0) target = $region25
  $region24: #{bottleneck_forward.6} parent=0 // pred_region
    _
  $region25: #{bottleneck_forward.6} parent=0 // pred_fallthru
    _
  // Predicated region
  $region26: #{bottleneck_forward.6} parent=0 // pred_check
    _
  $region27: #{bottleneck_forward.6} parent=0 // pred_check_branch
    %296 = sbr.rel (0) target = $region29
  $region28: #{bottleneck_forward.6} parent=0 // pred_region
    _
  $region29: #{bottleneck_forward.6} parent=0 // pred_fallthru
    _
  // Predicated region
  $region30: #{bottleneck_forward.6} parent=0 // pred_check
    _
  $region31: #{bottleneck_forward.6} parent=0 // pred_check_branch
    %298 = sbr.rel (0) target = $region33
  $region32: #{bottleneck_forward.6} parent=0 // pred_region
    _
  $region33: #{bottleneck_forward.6} parent=0 // pred_fallthru
    _

// kernel: bottleneck_forward.4
$region0: #{bottleneck_forward.4}
  #allocation0 [shape = 'u32[]', space=smem, size = 0x4, offset = 0x4, fixed_abs, tag = 'smem constant byte address 0x4 - core index']
  #allocation1 [shape = 'u32[72,128]{1,0:T(1,128)}', space=vmem, size = 0x9000, scoped, tag = 'internal scratch']
  %s0 = inlined_call_operand.vmem [shape: bf16[128,128], index: 0, kind: input, shape index: {}]
  %s1 = inlined_call_operand.vmem [shape: bf16[128,128], index: 1, kind: input, shape index: {}]
  %s2 = inlined_call_operand.vmem [shape: f32[128,128], index: 2, kind: output, shape index: {0}]
  %s3 = inlined_call_operand.vmem [shape: f32[1,8,128], index: 3, kind: output, shape index: {1}]
  %4 = xla_tuple %s2, %s3
  %s5 = sld [smem:[#allocation0]]
  $region26: #{bottleneck_forward.4} parent=0
    _
  %s7 = ssub.s32 1, %s5
  %s8 = scalar_select 0, %s7, %s5
  // Predicated region
  $region2: #{bottleneck_forward.4} parent=0 // pred_check
    _
  $region3: #{bottleneck_forward.4} parent=0 // pred_check_branch
    %10 = sbr.rel (0) target = $region5
  $region4: #{bottleneck_forward.4} parent=0 // pred_region
    _
  $region5: #{bottleneck_forward.4} parent=0 // pred_fallthru
    _
  // Predicated region
  $region6: #{bottleneck_forward.4} parent=0 // pred_check
    _
  $region7: #{bottleneck_forward.4} parent=0 // pred_check_branch
    %12 = sbr.rel (0) target = $region9
  $region8: #{bottleneck_forward.4} parent=0 // pred_region
    _
  $region9: #{bottleneck_forward.4} parent=0 // pred_fallthru
    _
  %v13 = vld [vmem:[%s0] sm:$0xf]
  %v14 = vld [vmem:[%s0 + $0x4] sm:$0xf]
  %v15 = vld [vmem:[%s0 + $0x8] sm:$0xf]
  %v16 = vld [vmem:[%s0 + $0xc] sm:$0xf]
  %v17 = vld [vmem:[%s0 + $0x10] sm:$0xf]
  %v18 = vld [vmem:[%s0 + $0x14] sm:$0xf]
  %v19 = vld [vmem:[%s0 + $0x18] sm:$0xf]
  %v20 = vld [vmem:[%s0 + $0x1c] sm:$0xf]
  %v21 = vld [vmem:[%s0 + $0x20] sm:$0xf]
  %v22 = vld [vmem:[%s0 + $0x24] sm:$0xf]
  %v23 = vld [vmem:[%s0 + $0x28] sm:$0xf]
  %v24 = vld [vmem:[%s0 + $0x2c] sm:$0xf]
  %v25 = vld [vmem:[%s0 + $0x30] sm:$0xf]
  %v26 = vld [vmem:[%s0 + $0x34] sm:$0xf]
  %v27 = vld [vmem:[%s0 + $0x38] sm:$0xf]
  %v28 = vld [vmem:[%s0 + $0x3c] sm:$0xf]
  %v29 = vld [vmem:[%s1] sm:$0xf]
  %v30 = vld [vmem:[%s1 + $0x4] sm:$0xf]
  %v31 = vld [vmem:[%s1 + $0x8] sm:$0xf]
  %v32 = vld [vmem:[%s1 + $0xc] sm:$0xf]
  %v33 = vld [vmem:[%s1 + $0x10] sm:$0xf]
  %v34 = vld [vmem:[%s1 + $0x14] sm:$0xf]
  %v35 = vld [vmem:[%s1 + $0x18] sm:$0xf]
  %v36 = vld [vmem:[%s1 + $0x1c] sm:$0xf]
  %v37 = vld [vmem:[%s1 + $0x20] sm:$0xf]
  %v38 = vld [vmem:[%s1 + $0x24] sm:$0xf]
  %v39 = vld [vmem:[%s1 + $0x28] sm:$0xf]
  %v40 = vld [vmem:[%s1 + $0x2c] sm:$0xf]
  %v41 = vld [vmem:[%s1 + $0x30] sm:$0xf]
  %v42 = vld [vmem:[%s1 + $0x34] sm:$0xf]
  %v43 = vld [vmem:[%s1 + $0x38] sm:$0xf]
  %v44 = vld [vmem:[%s1 + $0x3c] sm:$0xf]
  %v61 = vunpack.c.l.b16 %v13
  %v62 = vunpack.c.l.b16 %v14
  %v63 = vunpack.c.l.b16 %v15
  %v64 = vunpack.c.l.b16 %v16
  %v65 = vunpack.c.l.b16 %v17
  %v66 = vunpack.c.l.b16 %v18
  %v67 = vunpack.c.l.b16 %v19
  %v68 = vunpack.c.l.b16 %v20
  %v69 = vunpack.c.l.b16 %v21
  %v70 = vunpack.c.l.b16 %v22
  %v71 = vunpack.c.l.b16 %v23
  %v72 = vunpack.c.l.b16 %v24
  %v73 = vunpack.c.l.b16 %v25
  %v74 = vunpack.c.l.b16 %v26
  %v75 = vunpack.c.l.b16 %v27
  %v76 = vunpack.c.l.b16 %v28
  %v77 = vpack.c.b16 %v62, %v61
  %v78 = vpack.c.b16 %v64, %v63
  %v79 = vpack.c.b16 %v66, %v65
  %v80 = vpack.c.b16 %v68, %v67
  %v81 = vpack.c.b16 %v70, %v69
  %v82 = vpack.c.b16 %v72, %v71
  %v83 = vpack.c.b16 %v74, %v73
  %v84 = vpack.c.b16 %v76, %v75
  %v109 = vunpack.c.l.b16 %v29
  %v110 = vunpack.c.l.b16 %v30
  %v111 = vunpack.c.l.b16 %v31
  %v112 = vunpack.c.l.b16 %v32
  %v113 = vunpack.c.l.b16 %v33
  %v114 = vunpack.c.l.b16 %v34
  %v115 = vunpack.c.l.b16 %v35
  %v116 = vunpack.c.l.b16 %v36
  %v117 = vunpack.c.l.b16 %v37
  %v118 = vunpack.c.l.b16 %v38
  %v119 = vunpack.c.l.b16 %v39
  %v120 = vunpack.c.l.b16 %v40
  %v121 = vunpack.c.l.b16 %v41
  %v122 = vunpack.c.l.b16 %v42
  %v123 = vunpack.c.l.b16 %v43
  %v124 = vunpack.c.l.b16 %v44
  %v125 = vpack.c.b16 %v110, %v109
  %v126 = vpack.c.b16 %v112, %v111
  %v127 = vpack.c.b16 %v114, %v113
  %v128 = vpack.c.b16 %v116, %v115
  %v129 = vpack.c.b16 %v118, %v117
  %v130 = vpack.c.b16 %v120, %v119
  %v131 = vpack.c.b16 %v122, %v121
  %v132 = vpack.c.b16 %v124, %v123
  %141 = vmatpush.bf16.msra.mxu0 %v132
  %142 = vmatpush.bf16.msra.mxu0 %v131
  %143 = vmatpush.bf16.msra.mxu0 %v130
  %144 = vmatpush.bf16.msra.mxu0 %v129
  %145 = vmatpush.bf16.msra.mxu0 %v128
  %146 = vmatpush.bf16.msra.mxu0 %v127
  %147 = vmatpush.bf16.msra.mxu0 %v126
  %148 = vmatpush.bf16.msra.mxu0 %v125
  %149 = vmatmul.bf16.gmra.mxu0 %v77
  %v150 = vpop.f32.mrf.mxu0
  %v151 = vadd.f32 0.0, %v150
  %v152 = vpop.f32.mrf.mxu0
  %v153 = vadd.f32 0.0, %v152
  %154 = vmatmul.bf16.gmra.mxu0 %v78
  %v155 = vpop.f32.mrf.mxu0
  %v156 = vadd.f32 0.0, %v155
  %v157 = vpop.f32.mrf.mxu0
  %v158 = vadd.f32 0.0, %v157
  %159 = vmatmul.bf16.gmra.mxu0 %v79
  %v160 = vpop.f32.mrf.mxu0
  %v161 = vadd.f32 0.0, %v160
  %v162 = vpop.f32.mrf.mxu0
  %v163 = vadd.f32 0.0, %v162
  %164 = vmatmul.bf16.gmra.mxu0 %v80
  %v165 = vpop.f32.mrf.mxu0
  %v166 = vadd.f32 0.0, %v165
  %v167 = vpop.f32.mrf.mxu0
  %v168 = vadd.f32 0.0, %v167
  %169 = vmatmul.bf16.gmra.mxu0 %v81
  %v170 = vpop.f32.mrf.mxu0
  %v171 = vadd.f32 0.0, %v170
  %v172 = vpop.f32.mrf.mxu0
  %v173 = vadd.f32 0.0, %v172
  %174 = vmatmul.bf16.gmra.mxu0 %v82
  %v175 = vpop.f32.mrf.mxu0
  %v176 = vadd.f32 0.0, %v175
  %v177 = vpop.f32.mrf.mxu0
  %v178 = vadd.f32 0.0, %v177
  %179 = vmatmul.bf16.gmra.mxu0 %v83
  %v180 = vpop.f32.mrf.mxu0
  %v181 = vadd.f32 0.0, %v180
  %v182 = vpop.f32.mrf.mxu0
  %v183 = vadd.f32 0.0, %v182
  %184 = vmatmul.bf16.gmra.mxu0 %v84
  %v185 = vpop.f32.mrf.mxu0
  %v186 = vadd.f32 0.0, %v185
  %v187 = vpop.f32.mrf.mxu0
  %v188 = vadd.f32 0.0, %v187
  %189 = vdwg.mxu0
  %190 = vst [vmem:[%s2] sm:$0xff] %v151
  %191 = vst [vmem:[%s2 + $0x8] sm:$0xff] %v153
  %192 = vst [vmem:[%s2 + $0x10] sm:$0xff] %v156
  %193 = vst [vmem:[%s2 + $0x18] sm:$0xff] %v158
  %194 = vst [vmem:[%s2 + $0x20] sm:$0xff] %v161
  %195 = vst [vmem:[%s2 + $0x28] sm:$0xff] %v163
  %196 = vst [vmem:[%s2 + $0x30] sm:$0xff] %v166
  %197 = vst [vmem:[%s2 + $0x38] sm:$0xff] %v168
  %198 = vst [vmem:[%s2 + $0x40] sm:$0xff] %v171
  %199 = vst [vmem:[%s2 + $0x48] sm:$0xff] %v173
  %200 = vst [vmem:[%s2 + $0x50] sm:$0xff] %v176
  %201 = vst [vmem:[%s2 + $0x58] sm:$0xff] %v178
  %202 = vst [vmem:[%s2 + $0x60] sm:$0xff] %v181
  %203 = vst [vmem:[%s2 + $0x68] sm:$0xff] %v183
  %204 = vst [vmem:[%s2 + $0x70] sm:$0xff] %v186
  %205 = vst [vmem:[%s2 + $0x78] sm:$0xff] %v188
  %v206 = vadd.f32 %v151, %v153
  %v207 = vadd.f32 %v206, %v156
  %v208 = vadd.f32 %v207, %v158
  %v209 = vadd.f32 %v208, %v161
  %v210 = vadd.f32 %v209, %v163
  %v211 = vadd.f32 %v210, %v166
  %v212 = vadd.f32 %v211, %v168
  %v213 = vadd.f32 %v212, %v171
  %v214 = vadd.f32 %v213, %v173
  %v215 = vadd.f32 %v214, %v176
  %v216 = vadd.f32 %v215, %v178
  %v217 = vadd.f32 %v216, %v181
  %v218 = vadd.f32 %v217, %v183
  %v219 = vadd.f32 %v218, %v186
  %v220 = vadd.f32 %v219, %v188
  %v221 = vrot.slane %v220, 4
  %v222 = vadd.f32 %v220, %v221
  %v223 = vrot.slane %v222, 2
  %v224 = vadd.f32 %v222, %v223
  %v225 = vrot.slane %v224, 1
  %v226 = vadd.f32 %v224, %v225
  %v227 = vmul.f32 %v151, %v151
  %v228 = vmul.f32 %v153, %v153
  %v229 = vmul.f32 %v156, %v156
  %v230 = vmul.f32 %v158, %v158
  %v231 = vmul.f32 %v161, %v161
  %v232 = vmul.f32 %v163, %v163
  %v233 = vmul.f32 %v166, %v166
  %v234 = vmul.f32 %v168, %v168
  %v235 = vmul.f32 %v171, %v171
  %v236 = vmul.f32 %v173, %v173
  %v237 = vmul.f32 %v176, %v176
  %v238 = vmul.f32 %v178, %v178
  %v239 = vmul.f32 %v181, %v181
  %v240 = vmul.f32 %v183, %v183
  %v241 = vmul.f32 %v186, %v186
  %v242 = vmul.f32 %v188, %v188
  %v243 = vadd.f32 %v227, %v228
  %v244 = vadd.f32 %v243, %v229
  %v245 = vadd.f32 %v244, %v230
  %v246 = vadd.f32 %v245, %v231
  %v247 = vadd.f32 %v246, %v232
  %v248 = vadd.f32 %v247, %v233
  %v249 = vadd.f32 %v248, %v234
  %v250 = vadd.f32 %v249, %v235
  %v251 = vadd.f32 %v250, %v236
  %v252 = vadd.f32 %v251, %v237
  %v253 = vadd.f32 %v252, %v238
  %v254 = vadd.f32 %v253, %v239
  %v255 = vadd.f32 %v254, %v240
  %v256 = vadd.f32 %v255, %v241
  %v257 = vadd.f32 %v256, %v242
  %v258 = vrot.slane %v257, 4
  %v259 = vadd.f32 %v257, %v258
  %v260 = vrot.slane %v259, 2
  %v261 = vadd.f32 %v259, %v260
  %v262 = vrot.slane %v261, 1
  %v263 = vadd.f32 %v261, %v262
  %vm264 = vcmask 1040384
  %v265 = vsel %vm264, %v226, %v263
  %vm266 = vcmask 1041408
  %v267 = vsel %vm266, %v265, 0.0
  %268 = vst [vmem:[%s3] sm:$0xff] %v267
  // Predicated region
  $region10: #{bottleneck_forward.4} parent=0 // pred_check
    _
  $region11: #{bottleneck_forward.4} parent=0 // pred_check_branch
    %270 = sbr.rel (0) target = $region13
  $region12: #{bottleneck_forward.4} parent=0 // pred_region
    _
  $region13: #{bottleneck_forward.4} parent=0 // pred_fallthru
    _
  // Predicated region
  $region14: #{bottleneck_forward.4} parent=0 // pred_check
    _
  $region15: #{bottleneck_forward.4} parent=0 // pred_check_branch
    %272 = sbr.rel (0) target = $region17
  $region16: #{bottleneck_forward.4} parent=0 // pred_region
    _
  $region17: #{bottleneck_forward.4} parent=0 // pred_fallthru
    _
  // Predicated region
  $region18: #{bottleneck_forward.4} parent=0 // pred_check
    _
  $region19: #{bottleneck_forward.4} parent=0 // pred_check_branch
    %274 = sbr.rel (0) target = $region21
  $region20: #{bottleneck_forward.4} parent=0 // pred_region
    _
  $region21: #{bottleneck_forward.4} parent=0 // pred_fallthru
    _
  // Predicated region
  $region22: #{bottleneck_forward.4} parent=0 // pred_check
    _
  $region23: #{bottleneck_forward.4} parent=0 // pred_check_branch
    %276 = sbr.rel (0) target = $region25
  $region24: #{bottleneck_forward.4} parent=0 // pred_region
    _
  $region25: #{bottleneck_forward.4} parent=0 // pred_fallthru
    _

// kernel: bottleneck_forward.7
$region0: #{bottleneck_forward.7}
  #allocation0 [shape = 'u32[]', space=smem, size = 0x4, offset = 0x4, fixed_abs, tag = 'smem constant byte address 0x4 - core index']
  #allocation1 [shape = 'u32[72,128]{1,0:T(1,128)}', space=vmem, size = 0x9000, scoped, tag = 'internal scratch']
  %s0 = inlined_call_operand.vmem [shape: f32[128,128], index: 0, kind: input, shape index: {}]
  %s1 = inlined_call_operand.vmem [shape: f32[128,128], index: 1, kind: input, shape index: {}]
  %s2 = inlined_call_operand.vmem [shape: f32[1,128], index: 2, kind: input, shape index: {}]
  %s3 = inlined_call_operand.vmem [shape: f32[1,128], index: 3, kind: input, shape index: {}]
  %s4 = inlined_call_operand.hbm [shape: f32[128,128], index: 4, kind: output, shape index: {}]
  %s5 = sld [smem:[#allocation0]]
  $region26: #{bottleneck_forward.7} parent=0
    _
  %s7 = ssub.s32 1, %s5
  %s8 = scalar_select 0, %s7, %s5
  $region1: #{bottleneck_forward.7} parent=0
    #allocation2 [shape = 'u8[65536]{0}', space=vmem, size = 0x10000, scoped, tag = 'output window, operand 0, single buffered']
    #allocation3 [shape = 's32[1]{0}', space=sflag, size = 0x4, scoped, tag = 'scoped memory for bottleneck_forward.7']
    %9 = vsyncpa [#allocation3], 0
    // Predicated region
    $region2: #{bottleneck_forward.7} parent=1 // pred_check
      _
    $region3: #{bottleneck_forward.7} parent=1 // pred_check_branch
      %11 = sbr.rel (0) target = $region5
    $region4: #{bottleneck_forward.7} parent=1 // pred_region
      _
    $region5: #{bottleneck_forward.7} parent=1 // pred_fallthru
      _
    // Predicated region
    $region6: #{bottleneck_forward.7} parent=1 // pred_check
      _
    $region7: #{bottleneck_forward.7} parent=1 // pred_check_branch
      %13 = sbr.rel (0) target = $region9
    $region8: #{bottleneck_forward.7} parent=1 // pred_region
      _
    $region9: #{bottleneck_forward.7} parent=1 // pred_fallthru
      _
    // Predicated region
    $region10: #{bottleneck_forward.7} parent=1 // pred_check
      _
    $region11: #{bottleneck_forward.7} parent=1 // pred_check_branch
      %15 = sbr.rel (0) target = $region13
    $region12: #{bottleneck_forward.7} parent=1 // pred_region
      _
    $region13: #{bottleneck_forward.7} parent=1 // pred_fallthru
      _
    // Predicated region
    $region14: #{bottleneck_forward.7} parent=1 // pred_check
      _
    $region15: #{bottleneck_forward.7} parent=1 // pred_check_branch
      %17 = sbr.rel (0) target = $region17
    $region16: #{bottleneck_forward.7} parent=1 // pred_region
      _
    $region17: #{bottleneck_forward.7} parent=1 // pred_fallthru
      _
    %v18 = vld [vmem:[%s0] sm:$0xff]
    %v19 = vld [vmem:[%s0 + $0x8] sm:$0xff]
    %v20 = vld [vmem:[%s0 + $0x10] sm:$0xff]
    %v21 = vld [vmem:[%s0 + $0x18] sm:$0xff]
    %v22 = vld [vmem:[%s0 + $0x20] sm:$0xff]
    %v23 = vld [vmem:[%s0 + $0x28] sm:$0xff]
    %v24 = vld [vmem:[%s0 + $0x30] sm:$0xff]
    %v25 = vld [vmem:[%s0 + $0x38] sm:$0xff]
    %v26 = vld [vmem:[%s0 + $0x40] sm:$0xff]
    %v27 = vld [vmem:[%s0 + $0x48] sm:$0xff]
    %v28 = vld [vmem:[%s0 + $0x50] sm:$0xff]
    %v29 = vld [vmem:[%s0 + $0x58] sm:$0xff]
    %v30 = vld [vmem:[%s0 + $0x60] sm:$0xff]
    %v31 = vld [vmem:[%s0 + $0x68] sm:$0xff]
    %v32 = vld [vmem:[%s0 + $0x70] sm:$0xff]
    %v33 = vld [vmem:[%s0 + $0x78] sm:$0xff]
    %v34 = vld [vmem:[%s2] sm:$0x1]
    %v36 = vperm.slane %v34, 0
    %v38 = vmul.f32 %v18, %v36
    %v39 = vmul.f32 %v19, %v36
    %v40 = vmul.f32 %v20, %v36
    %v41 = vmul.f32 %v21, %v36
    %v42 = vmul.f32 %v22, %v36
    %v43 = vmul.f32 %v23, %v36
    %v44 = vmul.f32 %v24, %v36
    %v45 = vmul.f32 %v25, %v36
    %v46 = vmul.f32 %v26, %v36
    %v47 = vmul.f32 %v27, %v36
    %v48 = vmul.f32 %v28, %v36
    %v49 = vmul.f32 %v29, %v36
    %v50 = vmul.f32 %v30, %v36
    %v51 = vmul.f32 %v31, %v36
    %v52 = vmul.f32 %v32, %v36
    %v53 = vmul.f32 %v33, %v36
    %v54 = vld [vmem:[%s3] sm:$0x1]
    %v56 = vperm.slane %v54, 0
    %v58 = vadd.f32 %v38, %v56
    %v59 = vadd.f32 %v39, %v56
    %v60 = vadd.f32 %v40, %v56
    %v61 = vadd.f32 %v41, %v56
    %v62 = vadd.f32 %v42, %v56
    %v63 = vadd.f32 %v43, %v56
    %v64 = vadd.f32 %v44, %v56
    %v65 = vadd.f32 %v45, %v56
    %v66 = vadd.f32 %v46, %v56
    %v67 = vadd.f32 %v47, %v56
    %v68 = vadd.f32 %v48, %v56
    %v69 = vadd.f32 %v49, %v56
    %v70 = vadd.f32 %v50, %v56
    %v71 = vadd.f32 %v51, %v56
    %v72 = vadd.f32 %v52, %v56
    %v73 = vadd.f32 %v53, %v56
    %v74 = vld [vmem:[%s1] sm:$0xff]
    %v75 = vld [vmem:[%s1 + $0x8] sm:$0xff]
    %v76 = vld [vmem:[%s1 + $0x10] sm:$0xff]
    %v77 = vld [vmem:[%s1 + $0x18] sm:$0xff]
    %v78 = vld [vmem:[%s1 + $0x20] sm:$0xff]
    %v79 = vld [vmem:[%s1 + $0x28] sm:$0xff]
    %v80 = vld [vmem:[%s1 + $0x30] sm:$0xff]
    %v81 = vld [vmem:[%s1 + $0x38] sm:$0xff]
    %v82 = vld [vmem:[%s1 + $0x40] sm:$0xff]
    %v83 = vld [vmem:[%s1 + $0x48] sm:$0xff]
    %v84 = vld [vmem:[%s1 + $0x50] sm:$0xff]
    %v85 = vld [vmem:[%s1 + $0x58] sm:$0xff]
    %v86 = vld [vmem:[%s1 + $0x60] sm:$0xff]
    %v87 = vld [vmem:[%s1 + $0x68] sm:$0xff]
    %v88 = vld [vmem:[%s1 + $0x70] sm:$0xff]
    %v89 = vld [vmem:[%s1 + $0x78] sm:$0xff]
    %v90 = vadd.f32 %v58, %v74
    %v91 = vadd.f32 %v59, %v75
    %v92 = vadd.f32 %v60, %v76
    %v93 = vadd.f32 %v61, %v77
    %v94 = vadd.f32 %v62, %v78
    %v95 = vadd.f32 %v63, %v79
    %v96 = vadd.f32 %v64, %v80
    %v97 = vadd.f32 %v65, %v81
    %v98 = vadd.f32 %v66, %v82
    %v99 = vadd.f32 %v67, %v83
    %v100 = vadd.f32 %v68, %v84
    %v101 = vadd.f32 %v69, %v85
    %v102 = vadd.f32 %v70, %v86
    %v103 = vadd.f32 %v71, %v87
    %v104 = vadd.f32 %v72, %v88
    %v105 = vadd.f32 %v73, %v89
    %v106 = vmax.f32 %v90, 0.0
    %v107 = vmax.f32 %v91, 0.0
    %v108 = vmax.f32 %v92, 0.0
    %v109 = vmax.f32 %v93, 0.0
    %v110 = vmax.f32 %v94, 0.0
    %v111 = vmax.f32 %v95, 0.0
    %v112 = vmax.f32 %v96, 0.0
    %v113 = vmax.f32 %v97, 0.0
    %v114 = vmax.f32 %v98, 0.0
    %v115 = vmax.f32 %v99, 0.0
    %v116 = vmax.f32 %v100, 0.0
    %v117 = vmax.f32 %v101, 0.0
    %v118 = vmax.f32 %v102, 0.0
    %v119 = vmax.f32 %v103, 0.0
    %v120 = vmax.f32 %v104, 0.0
    %v121 = vmax.f32 %v105, 0.0
    %122 = vst [vmem:[#allocation2] sm:$0xff] %v106
    %123 = vst [vmem:[#allocation2 + $0x8] sm:$0xff] %v107
    %124 = vst [vmem:[#allocation2 + $0x10] sm:$0xff] %v108
    %125 = vst [vmem:[#allocation2 + $0x18] sm:$0xff] %v109
    %126 = vst [vmem:[#allocation2 + $0x20] sm:$0xff] %v110
    %127 = vst [vmem:[#allocation2 + $0x28] sm:$0xff] %v111
    %128 = vst [vmem:[#allocation2 + $0x30] sm:$0xff] %v112
    %129 = vst [vmem:[#allocation2 + $0x38] sm:$0xff] %v113
    %130 = vst [vmem:[#allocation2 + $0x40] sm:$0xff] %v114
    %131 = vst [vmem:[#allocation2 + $0x48] sm:$0xff] %v115
    %132 = vst [vmem:[#allocation2 + $0x50] sm:$0xff] %v116
    %133 = vst [vmem:[#allocation2 + $0x58] sm:$0xff] %v117
    %134 = vst [vmem:[#allocation2 + $0x60] sm:$0xff] %v118
    %135 = vst [vmem:[#allocation2 + $0x68] sm:$0xff] %v119
    %136 = vst [vmem:[#allocation2 + $0x70] sm:$0xff] %v120
    %137 = vst [vmem:[#allocation2 + $0x78] sm:$0xff] %v121
    // Predicated region
    $region18: #{bottleneck_forward.7} parent=1 // pred_check
      _
    $region19: #{bottleneck_forward.7} parent=1 // pred_check_branch
      %139 = sbr.rel (0) target = $region21
    $region20: #{bottleneck_forward.7} parent=1 // pred_region
      %141 = vsyncadd [#allocation3], 0
      %s142 = sshll.u32 [#allocation2], 4
      %s143 = int_to_ptr.vmem [resolvable:$true] %s142
      %s144 = sshll.u32 %s4, 4
      %s145 = int_to_ptr.hbm [resolvable:$true] %s144
      %150 = dma.vmem_to_hbm [thread:$0]  %s143, 2048, %s145, [#allocation3], 128, 128, 8
    $region21: #{bottleneck_forward.7} parent=1 // pred_fallthru
      _
    // Predicated region
    $region22: #{bottleneck_forward.7} parent=1 // pred_check
      _
    $region23: #{bottleneck_forward.7} parent=1 // pred_check_branch
      %152 = sbr.rel (0) target = $region25
    $region24: #{bottleneck_forward.7} parent=1 // pred_region
      %154 = dma.done [#allocation3], 2048
    $region25: #{bottleneck_forward.7} parent=1 // pred_fallthru
      _
    %155 = vsyncpa [#allocation3], 1

// kernel: bottleneck_forward.5
$region0: #{bottleneck_forward.5}
  #allocation0 [shape = 'u32[]', space=smem, size = 0x4, offset = 0x4, fixed_abs, tag = 'smem constant byte address 0x4 - core index']
  #allocation1 [shape = 'u32[72,128]{1,0:T(1,128)}', space=vmem, size = 0x9000, scoped, tag = 'internal scratch']
  %s0 = inlined_call_operand.vmem [shape: f32[2,8,8,128], index: 0, kind: input, shape index: {}]
  %s1 = inlined_call_operand.vmem [shape: f32[1,128], index: 1, kind: input, shape index: {}]
  %s2 = inlined_call_operand.vmem [shape: f32[1,128], index: 2, kind: input, shape index: {}]
  %s3 = inlined_call_operand.vmem [shape: bf16[1152,128], index: 3, kind: input, shape index: {}]
  %s4 = inlined_call_operand.vmem [shape: f32[2,8,8,128], index: 4, kind: output, shape index: {0}]
  %s5 = inlined_call_operand.vmem [shape: f32[2,8,128], index: 5, kind: output, shape index: {1}]
  %6 = xla_tuple %s4, %s5
  %s7 = sld [smem:[#allocation0]]
  $region57: #{bottleneck_forward.5} parent=0
    _
  %s9 = ssub.s32 1, %s7
  %s10 = scalar_select 0, %s9, %s7
  loop: start=0, step=1, limit=4
  $region2: #{bottleneck_forward.5} parent=0 // loop_pre_header
    _
  $region3: #{bottleneck_forward.5} parent=0 // loop_header
    %s12 = sphi 0, %s16
    %p13 = scmp.ge.s32.totalorder %s12, 4
    %s22 = sphi 0, %s24
    %s25 = sphi 0, %s22
    %s26 = sphi 0, %s25
    %s42 = sphi 0, %s26
    %s46 = sphi 0, %s46
    %s48 = sphi 0, %s46
    %s49 = sphi 0, %s48
    %s63 = sphi 0, %s49
    %s67 = sphi 0, %s67
    %s69 = sphi 0, %s67
    %s70 = sphi 0, %s69
    %s84 = sphi 0, %s70
    %s88 = sphi 0, %s88
    %s90 = sphi 0, %s88
    %s91 = sphi 0, %s90
    %s105 = sphi 0, %s91
    %s111 = sphi 0, %s113
    %s114 = sphi 0, %s111
    %s115 = sphi 0, %s114
    %s131 = sphi 0, %s115
    %s137 = sphi 0, %s139
    %s140 = sphi 0, %s137
    %s141 = sphi 0, %s140
    %s157 = sphi 0, %s141
  $region4: #{bottleneck_forward.5} parent=0 // loop_header_branch
    %15 = sbr.rel (%p13) target = $region8
  $region5: #{bottleneck_forward.5} parent=0 // loop_body
    %s17 = ssub.s32 %s12, 1
    %s18 = ssub.s32 %s12, 2
    %s19 = sadd.s32 %s12, 1
    %s20 = ssub.s32 %s12, %s19
    %p21 = scmp.eq.s32.totalorder %s20, 0
    %s23 = sadd.s32 %s22, 1
    %s24 = scalar_select %p21, %s22, %s23
    %p27 = pneg %p21
    %p28 = scmp.eq.s32.totalorder %s12, 1
    %p29 = por %p27, %p28
    %p30 = scmp.ne.s32.totalorder %s22, %s25
    %p31 = scmp.eq.s32.totalorder %s12, 0
    %p32 = por %p30, %p31
    %p33 = scmp.ne.s32.totalorder %s22, %s25
    %p34 = scmp.eq.s32.totalorder %s17, 1
    %p35 = por %p33, %p34
    %p36 = scmp.ne.s32.totalorder %s25, %s26
    %p37 = scmp.eq.s32.totalorder %s17, 0
    %p38 = por %p36, %p37
    %p39 = scmp.ne.s32.totalorder %s25, %s26
    %p40 = scmp.eq.s32.totalorder %s18, 1
    %p41 = por %p39, %p40
    %p43 = scmp.ne.s32.totalorder %s26, %s42
    %p44 = scmp.eq.s32.totalorder %s18, 0
    %p45 = por %p43, %p44
    %s47 = sadd.s32 %s46, 1
    %p50 = scmp.eq.s32.totalorder %s12, 1
    %p51 = scmp.ne.s32.totalorder %s46, %s48
    %p52 = scmp.eq.s32.totalorder %s12, 0
    %p53 = por %p51, %p52
    %p54 = scmp.ne.s32.totalorder %s46, %s48
    %p55 = scmp.eq.s32.totalorder %s17, 1
    %p56 = por %p54, %p55
    %p57 = scmp.ne.s32.totalorder %s48, %s49
    %p58 = scmp.eq.s32.totalorder %s17, 0
    %p59 = por %p57, %p58
    %p60 = scmp.ne.s32.totalorder %s48, %s49
    %p61 = scmp.eq.s32.totalorder %s18, 1
    %p62 = por %p60, %p61
    %p64 = scmp.ne.s32.totalorder %s49, %s63
    %p65 = scmp.eq.s32.totalorder %s18, 0
    %p66 = por %p64, %p65
    %s68 = sadd.s32 %s67, 1
    %p71 = scmp.eq.s32.totalorder %s12, 1
    %p72 = scmp.ne.s32.totalorder %s67, %s69
    %p73 = scmp.eq.s32.totalorder %s12, 0
    %p74 = por %p72, %p73
    %p75 = scmp.ne.s32.totalorder %s67, %s69
    %p76 = scmp.eq.s32.totalorder %s17, 1
    %p77 = por %p75, %p76
    %p78 = scmp.ne.s32.totalorder %s69, %s70
    %p79 = scmp.eq.s32.totalorder %s17, 0
    %p80 = por %p78, %p79
    %p81 = scmp.ne.s32.totalorder %s69, %s70
    %p82 = scmp.eq.s32.totalorder %s18, 1
    %p83 = por %p81, %p82
    %p85 = scmp.ne.s32.totalorder %s70, %s84
    %p86 = scmp.eq.s32.totalorder %s18, 0
    %p87 = por %p85, %p86
    %s89 = sadd.s32 %s88, 1
    %p92 = scmp.eq.s32.totalorder %s12, 1
    %p93 = scmp.ne.s32.totalorder %s88, %s90
    %p94 = scmp.eq.s32.totalorder %s12, 0
    %p95 = por %p93, %p94
    %p96 = scmp.ne.s32.totalorder %s88, %s90
    %p97 = scmp.eq.s32.totalorder %s17, 1
    %p98 = por %p96, %p97
    %p99 = scmp.ne.s32.totalorder %s90, %s91
    %p100 = scmp.eq.s32.totalorder %s17, 0
    %p101 = por %p99, %p100
    %p102 = scmp.ne.s32.totalorder %s90, %s91
    %p103 = scmp.eq.s32.totalorder %s18, 1
    %p104 = por %p102, %p103
    %p106 = scmp.ne.s32.totalorder %s91, %s105
    %p107 = scmp.eq.s32.totalorder %s18, 0
    %p108 = por %p106, %p107
    %s109 = ssub.s32 %s12, %s19
    %p110 = scmp.eq.s32.totalorder %s109, 0
    %s112 = sadd.s32 %s111, 1
    %s113 = scalar_select %p110, %s111, %s112
    %p116 = pneg %p110
    %p117 = scmp.eq.s32.totalorder %s12, 1
    %p118 = por %p116, %p117
    %p119 = scmp.ne.s32.totalorder %s111, %s114
    %p120 = scmp.eq.s32.totalorder %s12, 0
    %p121 = por %p119, %p120
    %p122 = scmp.ne.s32.totalorder %s111, %s114
    %p123 = scmp.eq.s32.totalorder %s17, 1
    %p124 = por %p122, %p123
    %p125 = scmp.ne.s32.totalorder %s114, %s115
    %p126 = scmp.eq.s32.totalorder %s17, 0
    %p127 = por %p125, %p126
    %p128 = scmp.ne.s32.totalorder %s114, %s115
    %p129 = scmp.eq.s32.totalorder %s18, 1
    %p130 = por %p128, %p129
    %p132 = scmp.ne.s32.totalorder %s115, %s131
    %p133 = scmp.eq.s32.totalorder %s18, 0
    %p134 = por %p132, %p133
    %s135 = ssub.s32 %s12, %s19
    %p136 = scmp.eq.s32.totalorder %s135, 0
    %s138 = sadd.s32 %s137, 1
    %s139 = scalar_select %p136, %s137, %s138
    %p142 = pneg %p136
    %p143 = scmp.eq.s32.totalorder %s12, 1
    %p144 = por %p142, %p143
    %p145 = scmp.ne.s32.totalorder %s137, %s140
    %p146 = scmp.eq.s32.totalorder %s12, 0
    %p147 = por %p145, %p146
    %p148 = scmp.ne.s32.totalorder %s137, %s140
    %p149 = scmp.eq.s32.totalorder %s17, 1
    %p150 = por %p148, %p149
    %p151 = scmp.ne.s32.totalorder %s140, %s141
    %p152 = scmp.eq.s32.totalorder %s17, 0
    %p153 = por %p151, %p152
    %p154 = scmp.ne.s32.totalorder %s140, %s141
    %p155 = scmp.eq.s32.totalorder %s18, 1
    %p156 = por %p154, %p155
    %p158 = scmp.ne.s32.totalorder %s141, %s157
    %p159 = scmp.eq.s32.totalorder %s18, 0
    %p160 = por %p158, %p159
    %p161 = scmp.le.s32.totalorder 1, %s12
    %p162 = scmp.lt.s32.totalorder %s12, 3
    %p163 = pnand %p161, %p162
    %p164 = pneg %p163
    // Predicated region
    $region9: #{bottleneck_forward.5} parent=5 // pred_check
      _
    $region10: #{bottleneck_forward.5} parent=5 // pred_check_branch
      %166 = sbr.rel (%p163) target = $region12
    $region11: #{bottleneck_forward.5} parent=5 // pred_region
      %s167 = ssub.s32 %s12, 1
      // Predicated region
      $region13: #{bottleneck_forward.5} parent=11 // pred_check
        %p168 = pneg %p59
      $region14: #{bottleneck_forward.5} parent=11 // pred_check_branch
        %170 = sbr.rel (%p168) target = $region16
      $region15: #{bottleneck_forward.5} parent=11 // pred_region
        _
      $region16: #{bottleneck_forward.5} parent=11 // pred_fallthru
        _
      // Predicated region
      $region17: #{bottleneck_forward.5} parent=11 // pred_check
        %p171 = pneg %p80
      $region18: #{bottleneck_forward.5} parent=11 // pred_check_branch
        %173 = sbr.rel (%p171) target = $region20
      $region19: #{bottleneck_forward.5} parent=11 // pred_region
        _
      $region20: #{bottleneck_forward.5} parent=11 // pred_fallthru
        _
      // Predicated region
      $region21: #{bottleneck_forward.5} parent=11 // pred_check
        %p174 = pneg %p101
      $region22: #{bottleneck_forward.5} parent=11 // pred_check_branch
        %176 = sbr.rel (%p174) target = $region24
      $region23: #{bottleneck_forward.5} parent=11 // pred_region
        _
      $region24: #{bottleneck_forward.5} parent=11 // pred_fallthru
        _
    $region12: #{bottleneck_forward.5} parent=5 // pred_fallthru
      _
    %p177 = scmp.lt.s32.totalorder %s12, 2
    // Predicated region
    $region25: #{bottleneck_forward.5} parent=5 // pred_check
      %p178 = pneg %p177
    $region26: #{bottleneck_forward.5} parent=5 // pred_check_branch
      %180 = sbr.rel (%p178) target = $region28
    $region27: #{bottleneck_forward.5} parent=5 // pred_region
      // Predicated region
      $region29: #{bottleneck_forward.5} parent=27 // pred_check
        %p181 = pneg %p32
      $region30: #{bottleneck_forward.5} parent=27 // pred_check_branch
        %183 = sbr.rel (%p181) target = $region32
      $region31: #{bottleneck_forward.5} parent=27 // pred_region
        %p184 = scmp.lt.s32.totalorder %s12, 1
        %s185 = scalar_select %p184, %s12, 1
        %s186 = smul.addr %s185, 8
        %s187 = smul.addr %s186, 8
        %s188 = scalar_lea.vmem %s0, %s187
      $region32: #{bottleneck_forward.5} parent=27 // pred_fallthru
        _
    $region28: #{bottleneck_forward.5} parent=5 // pred_fallthru
      _
    %p189 = scmp.le.s32.totalorder 1, %s12
    %p190 = scmp.lt.s32.totalorder %s12, 3
    %p191 = pnand %p189, %p190
    %p192 = pneg %p191
    // Predicated region
    $region33: #{bottleneck_forward.5} parent=5 // pred_check
      _
    $region34: #{bottleneck_forward.5} parent=5 // pred_check_branch
      %194 = sbr.rel (%p191) target = $region36
    $region35: #{bottleneck_forward.5} parent=5 // pred_region
      %s195 = ssub.s32 %s12, 1
      %p196 = scmp.lt.s32.totalorder %s17, 1
      %s197 = scalar_select %p196, %s17, 1
      %s198 = smul.addr %s197, 8
      %s199 = smul.addr %s198, 8
      %s200 = scalar_lea.vmem %s0, %s199
      %p201 = pneg %p38
      %p202 = pneg %p35
      %p203 = pneg %p59
      %p204 = pneg %p56
      %p205 = pneg %p80
      %p206 = pneg %p77
      %p207 = pneg %p101
      %p208 = pneg %p98
      %p209 = pneg %p127
      %p210 = pneg %p124
      %p211 = scmp.lt.s32.totalorder %s17, 1
      %s212 = scalar_select %p211, %s17, 1
      %s213 = smul.addr %s212, 8
      %s214 = smul.addr %s213, 8
      %s215 = scalar_lea.vmem %s4, %s214
      %p216 = pneg %p153
      %p217 = pneg %p150
      %p218 = scmp.lt.s32.totalorder %s17, 1
      %s219 = scalar_select %p218, %s17, 1
      %s220 = smul.addr %s219, 8
      %s221 = scalar_lea.vmem %s5, %s220
      %p222 = scmp.lt.s32.totalorder %s17, 1
      %s223 = scalar_select %p222, %s17, 1
      %s224 = smul.addr %s223, 8
      %s225 = smul.addr %s224, 8
      %s226 = scalar_lea.vmem %s0, %s225
      %p227 = scmp.lt.s32.totalorder %s17, 1
      %s228 = scalar_select %p227, %s17, 1
      %s229 = smul.addr %s228, 8
      %s230 = smul.addr %s229, 8
      %s231 = scalar_lea.vmem %s4, %s230
      %p232 = scmp.lt.s32.totalorder %s17, 1
      %s233 = scalar_select %p232, %s17, 1
      %s234 = smul.addr %s233, 8
      %s235 = scalar_lea.vmem %s5, %s234
      %v236 = vld [vmem:[%s226] sm:$0xff]
      %v237 = vld [vmem:[%s226 + $0x8] sm:$0xff]
      %v238 = vld [vmem:[%s226 + $0x10] sm:$0xff]
      %v239 = vld [vmem:[%s226 + $0x18] sm:$0xff]
      %v240 = vld [vmem:[%s226 + $0x20] sm:$0xff]
      %v241 = vld [vmem:[%s226 + $0x28] sm:$0xff]
      %v242 = vld [vmem:[%s226 + $0x30] sm:$0xff]
      %v243 = vld [vmem:[%s226 + $0x38] sm:$0xff]
      %v244 = vld [vmem:[%s1] sm:$0x1]
      %v246 = vperm.slane %v244, 0
      %v248 = vmul.f32 %v236, %v246
      %v249 = vmul.f32 %v237, %v246
      %v250 = vmul.f32 %v238, %v246
      %v251 = vmul.f32 %v239, %v246
      %v252 = vmul.f32 %v240, %v246
      %v253 = vmul.f32 %v241, %v246
      %v254 = vmul.f32 %v242, %v246
      %v255 = vmul.f32 %v243, %v246
      %v256 = vld [vmem:[%s2] sm:$0x1]
      %v258 = vperm.slane %v256, 0
      %v260 = vadd.f32 %v248, %v258
      %v261 = vadd.f32 %v249, %v258
      %v262 = vadd.f32 %v250, %v258
      %v263 = vadd.f32 %v251, %v258
      %v264 = vadd.f32 %v252, %v258
      %v265 = vadd.f32 %v253, %v258
      %v266 = vadd.f32 %v254, %v258
      %v267 = vadd.f32 %v255, %v258
      %v268 = vmax.f32 %v260, 0.0
      %v269 = vmax.f32 %v261, 0.0
      %v270 = vmax.f32 %v262, 0.0
      %v271 = vmax.f32 %v263, 0.0
      %v272 = vmax.f32 %v264, 0.0
      %v273 = vmax.f32 %v265, 0.0
      %v274 = vmax.f32 %v266, 0.0
      %v275 = vmax.f32 %v267, 0.0
      %v285 = vrot.slane 0.0, 7
      %v286 = vrot.slane %v268, 7
      %v287 = vrot.slane %v269, 7
      %v288 = vrot.slane %v270, 7
      %v289 = vrot.slane %v271, 7
      %v290 = vrot.slane %v272, 7
      %v291 = vrot.slane %v273, 7
      %v292 = vrot.slane %v274, 7
      %v293 = vrot.slane %v275, 7
      %vm303 = vcmask 1040384
      %v304 = vsel %vm303, 0.0, %v285
      %v305 = vsel %vm303, 0.0, %v286
      %v306 = vsel %vm303, 0.0, %v287
      %v307 = vsel %vm303, 0.0, %v288
      %v308 = vsel %vm303, 0.0, %v289
      %v309 = vsel %vm303, 0.0, %v290
      %v310 = vsel %vm303, 0.0, %v291
      %v311 = vsel %vm303, 0.0, %v292
      %v312 = vsel %vm303, 0.0, %v293
      %v313 = vsel %vm303, %v285, 0.0
      %v314 = vsel %vm303, %v286, 0.0
      %v315 = vsel %vm303, %v287, 0.0
      %v316 = vsel %vm303, %v288, 0.0
      %v317 = vsel %vm303, %v289, 0.0
      %v318 = vsel %vm303, %v290, 0.0
      %v319 = vsel %vm303, %v291, 0.0
      %v320 = vsel %vm303, %v292, 0.0
      %v321 = vsel %vm303, %v293, 0.0
      %v322 = vpack.c.bf16 %v305, %v304
      %v323 = vpack.c.bf16 %v307, %v306
      %v324 = vpack.c.bf16 %v309, %v308
      %v325 = vpack.c.bf16 %v311, %v310
      %v326 = vld [vmem:[%s3] sm:$0xf]
      %v327 = vld [vmem:[%s3 + $0x4] sm:$0xf]
      %v328 = vld [vmem:[%s3 + $0x8] sm:$0xf]
      %v329 = vld [vmem:[%s3 + $0xc] sm:$0xf]
      %v330 = vld [vmem:[%s3 + $0x10] sm:$0xf]
      %v331 = vld [vmem:[%s3 + $0x14] sm:$0xf]
      %v332 = vld [vmem:[%s3 + $0x18] sm:$0xf]
      %v333 = vld [vmem:[%s3 + $0x1c] sm:$0xf]
      %v334 = vld [vmem:[%s3 + $0x20] sm:$0xf]
      %v335 = vld [vmem:[%s3 + $0x24] sm:$0xf]
      %v336 = vld [vmem:[%s3 + $0x28] sm:$0xf]
      %v337 = vld [vmem:[%s3 + $0x2c] sm:$0xf]
      %v338 = vld [vmem:[%s3 + $0x30] sm:$0xf]
      %v339 = vld [vmem:[%s3 + $0x34] sm:$0xf]
      %v340 = vld [vmem:[%s3 + $0x38] sm:$0xf]
      %v341 = vld [vmem:[%s3 + $0x3c] sm:$0xf]
      %vm358 = vcmask 1046528
      %v359 = vrot.slane %v304, 1
      %v360 = vrot.slane %v313, 1
      %v361 = vsel %vm358, %v359, %v360
      %v362 = vrot.slane %v305, 1
      %v363 = vrot.slane %v314, 1
      %v364 = vsel %vm358, %v362, %v363
      %v365 = vrot.slane %v306, 1
      %v366 = vrot.slane %v315, 1
      %v367 = vsel %vm358, %v365, %v366
      %v368 = vrot.slane %v307, 1
      %v369 = vrot.slane %v316, 1
      %v370 = vsel %vm358, %v368, %v369
      %v371 = vrot.slane %v308, 1
      %v372 = vrot.slane %v317, 1
      %v373 = vsel %vm358, %v371, %v372
      %v374 = vrot.slane %v309, 1
      %v375 = vrot.slane %v318, 1
      %v376 = vsel %vm358, %v374, %v375
      %v377 = vrot.slane %v310, 1
      %v378 = vrot.slane %v319, 1
      %v379 = vsel %vm358, %v377, %v378
      %v380 = vrot.slane %v311, 1
      %v381 = vrot.slane %v320, 1
      %v382 = vsel %vm358, %v380, %v381
      %v391 = vpack.c.bf16 %v364, %v361
      %v392 = vpack.c.bf16 %v370, %v367
      %v393 = vpack.c.bf16 %v376, %v373
      %v394 = vpack.c.bf16 %v382, %v379
      %v395 = vld [vmem:[%s3 + $0x40] sm:$0xf]
      %v396 = vld [vmem:[%s3 + $0x44] sm:$0xf]
      %v397 = vld [vmem:[%s3 + $0x48] sm:$0xf]
      %v398 = vld [vmem:[%s3 + $0x4c] sm:$0xf]
      %v399 = vld [vmem:[%s3 + $0x50] sm:$0xf]
      %v400 = vld [vmem:[%s3 + $0x54] sm:$0xf]
      %v401 = vld [vmem:[%s3 + $0x58] sm:$0xf]
      %v402 = vld [vmem:[%s3 + $0x5c] sm:$0xf]
      %v403 = vld [vmem:[%s3 + $0x60] sm:$0xf]
      %v404 = vld [vmem:[%s3 + $0x64] sm:$0xf]
      %v405 = vld [vmem:[%s3 + $0x68] sm:$0xf]
      %v406 = vld [vmem:[%s3 + $0x6c] sm:$0xf]
      %v407 = vld [vmem:[%s3 + $0x70] sm:$0xf]
      %v408 = vld [vmem:[%s3 + $0x74] sm:$0xf]
      %v409 = vld [vmem:[%s3 + $0x78] sm:$0xf]
      %v410 = vld [vmem:[%s3 + $0x7c] sm:$0xf]
      %v427 = vunpack.c.l.b16 %v395
      %v428 = vunpack.c.l.b16 %v396
      %v429 = vunpack.c.l.b16 %v397
      %v430 = vunpack.c.l.b16 %v398
      %v431 = vunpack.c.l.b16 %v399
      %v432 = vunpack.c.l.b16 %v400
      %v433 = vunpack.c.l.b16 %v401
      %v434 = vunpack.c.l.b16 %v402
      %v435 = vunpack.c.l.b16 %v403
      %v436 = vunpack.c.l.b16 %v404
      %v437 = vunpack.c.l.b16 %v405
      %v438 = vunpack.c.l.b16 %v406
      %v439 = vunpack.c.l.b16 %v407
      %v440 = vunpack.c.l.b16 %v408
      %v441 = vunpack.c.l.b16 %v409
      %v442 = vunpack.c.l.b16 %v410
      %v443 = vpack.c.b16 %v428, %v427
      %v444 = vpack.c.b16 %v430, %v429
      %v445 = vpack.c.b16 %v432, %v431
      %v446 = vpack.c.b16 %v434, %v433
      %v447 = vpack.c.b16 %v436, %v435
      %v448 = vpack.c.b16 %v438, %v437
      %v449 = vpack.c.b16 %v440, %v439
      %v450 = vpack.c.b16 %v442, %v441
      %459 = vmatpush.bf16.msra.mxu0 %v450
      %460 = vmatpush.bf16.msra.mxu0 %v449
      %461 = vmatpush.bf16.msra.mxu0 %v448
      %462 = vmatpush.bf16.msra.mxu0 %v447
      %463 = vmatpush.bf16.msra.mxu0 %v446
      %464 = vmatpush.bf16.msra.mxu0 %v445
      %465 = vmatpush.bf16.msra.mxu0 %v444
      %466 = vmatpush.bf16.msra.mxu0 %v443
      %467 = vmatmul.bf16.gmra.mxu0 %v391
      %v468 = vpop.f32.mrf.mxu0
      %v469 = vadd.f32 0.0, %v468
      %v470 = vpop.f32.mrf.mxu0
      %v471 = vadd.f32 0.0, %v470
      %472 = vmatmul.bf16.gmra.mxu0 %v392
      %v473 = vpop.f32.mrf.mxu0
      %v474 = vadd.f32 0.0, %v473
      %v475 = vpop.f32.mrf.mxu0
      %v476 = vadd.f32 0.0, %v475
      %477 = vmatmul.bf16.gmra.mxu0 %v393
      %v478 = vpop.f32.mrf.mxu0
      %v479 = vadd.f32 0.0, %v478
      %v480 = vpop.f32.mrf.mxu0
      %v481 = vadd.f32 0.0, %v480
      %482 = vmatmul.bf16.gmra.mxu0 %v394
      %v483 = vpop.f32.mrf.mxu0
      %v484 = vadd.f32 0.0, %v483
      %v485 = vpop.f32.mrf.mxu0
      %v486 = vadd.f32 0.0, %v485
      %487 = vdwg.mxu0
      %v504 = vunpack.c.l.b16 %v326
      %v505 = vunpack.c.l.b16 %v327
      %v506 = vunpack.c.l.b16 %v328
      %v507 = vunpack.c.l.b16 %v329
      %v508 = vunpack.c.l.b16 %v330
      %v509 = vunpack.c.l.b16 %v331
      %v510 = vunpack.c.l.b16 %v332
      %v511 = vunpack.c.l.b16 %v333
      %v512 = vunpack.c.l.b16 %v334
      %v513 = vunpack.c.l.b16 %v335
      %v514 = vunpack.c.l.b16 %v336
      %v515 = vunpack.c.l.b16 %v337
      %v516 = vunpack.c.l.b16 %v338
      %v517 = vunpack.c.l.b16 %v339
      %v518 = vunpack.c.l.b16 %v340
      %v519 = vunpack.c.l.b16 %v341
      %v520 = vpack.c.b16 %v505, %v504
      %v521 = vpack.c.b16 %v507, %v506
      %v522 = vpack.c.b16 %v509, %v508
      %v523 = vpack.c.b16 %v511, %v510
      %v524 = vpack.c.b16 %v513, %v512
      %v525 = vpack.c.b16 %v515, %v514
      %v526 = vpack.c.b16 %v517, %v516
      %v527 = vpack.c.b16 %v519, %v518
      %536 = vmatpush.bf16.msra.mxu0 %v527
      %537 = vmatpush.bf16.msra.mxu0 %v526
      %538 = vmatpush.bf16.msra.mxu0 %v525
      %539 = vmatpush.bf16.msra.mxu0 %v524
      %540 = vmatpush.bf16.msra.mxu0 %v523
      %541 = vmatpush.bf16.msra.mxu0 %v522
      %542 = vmatpush.bf16.msra.mxu0 %v521
      %543 = vmatpush.bf16.msra.mxu0 %v520
      %544 = vmatmul.bf16.gmra.mxu0 %v322
      %v545 = vpop.f32.mrf.mxu0
      %v546 = vadd.f32 %v469, %v545
      %v547 = vpop.f32.mrf.mxu0
      %v548 = vadd.f32 %v471, %v547
      %549 = vmatmul.bf16.gmra.mxu0 %v323
      %v550 = vpop.f32.mrf.mxu0
      %v551 = vadd.f32 %v474, %v550
      %v552 = vpop.f32.mrf.mxu0
      %v553 = vadd.f32 %v476, %v552
      %554 = vmatmul.bf16.gmra.mxu0 %v324
      %v555 = vpop.f32.mrf.mxu0
      %v556 = vadd.f32 %v479, %v555
      %v557 = vpop.f32.mrf.mxu0
      %v558 = vadd.f32 %v481, %v557
      %559 = vmatmul.bf16.gmra.mxu0 %v325
      %v560 = vpop.f32.mrf.mxu0
      %v561 = vadd.f32 %v484, %v560
      %v562 = vpop.f32.mrf.mxu0
      %v563 = vadd.f32 %v486, %v562
      %564 = vdwg.mxu0
      %vm565 = vcmask 1045504
      %v566 = vrot.slane %v304, 2
      %v567 = vrot.slane %v313, 2
      %v568 = vsel %vm565, %v566, %v567
      %v569 = vrot.slane %v305, 2
      %v570 = vrot.slane %v314, 2
      %v571 = vsel %vm565, %v569, %v570
      %v572 = vrot.slane %v306, 2
      %v573 = vrot.slane %v315, 2
      %v574 = vsel %vm565, %v572, %v573
      %v575 = vrot.slane %v307, 2
      %v576 = vrot.slane %v316, 2
      %v577 = vsel %vm565, %v575, %v576
      %v578 = vrot.slane %v308, 2
      %v579 = vrot.slane %v317, 2
      %v580 = vsel %vm565, %v578, %v579
      %v581 = vrot.slane %v309, 2
      %v582 = vrot.slane %v318, 2
      %v583 = vsel %vm565, %v581, %v582
      %v584 = vrot.slane %v310, 2
      %v585 = vrot.slane %v319, 2
      %v586 = vsel %vm565, %v584, %v585
      %v587 = vrot.slane %v311, 2
      %v588 = vrot.slane %v320, 2
      %v589 = vsel %vm565, %v587, %v588
      %v598 = vpack.c.bf16 %v571, %v568
      %v599 = vpack.c.bf16 %v577, %v574
      %v600 = vpack.c.bf16 %v583, %v580
      %v601 = vpack.c.bf16 %v589, %v586
      %v602 = vld [vmem:[%s3 + $0x80] sm:$0xf]
      %v603 = vld [vmem:[%s3 + $0x84] sm:$0xf]
      %v604 = vld [vmem:[%s3 + $0x88] sm:$0xf]
      %v605 = vld [vmem:[%s3 + $0x8c] sm:$0xf]
      %v606 = vld [vmem:[%s3 + $0x90] sm:$0xf]
      %v607 = vld [vmem:[%s3 + $0x94] sm:$0xf]
      %v608 = vld [vmem:[%s3 + $0x98] sm:$0xf]
      %v609 = vld [vmem:[%s3 + $0x9c] sm:$0xf]
      %v610 = vld [vmem:[%s3 + $0xa0] sm:$0xf]
      %v611 = vld [vmem:[%s3 + $0xa4] sm:$0xf]
      %v612 = vld [vmem:[%s3 + $0xa8] sm:$0xf]
      %v613 = vld [vmem:[%s3 + $0xac] sm:$0xf]
      %v614 = vld [vmem:[%s3 + $0xb0] sm:$0xf]
      %v615 = vld [vmem:[%s3 + $0xb4] sm:$0xf]
      %v616 = vld [vmem:[%s3 + $0xb8] sm:$0xf]
      %v617 = vld [vmem:[%s3 + $0xbc] sm:$0xf]
      %v634 = vunpack.c.l.b16 %v602
      %v635 = vunpack.c.l.b16 %v603
      %v636 = vunpack.c.l.b16 %v604
      %v637 = vunpack.c.l.b16 %v605
      %v638 = vunpack.c.l.b16 %v606
      %v639 = vunpack.c.l.b16 %v607
      %v640 = vunpack.c.l.b16 %v608
      %v641 = vunpack.c.l.b16 %v609
      %v642 = vunpack.c.l.b16 %v610
      %v643 = vunpack.c.l.b16 %v611
      %v644 = vunpack.c.l.b16 %v612
      %v645 = vunpack.c.l.b16 %v613
      %v646 = vunpack.c.l.b16 %v614
      %v647 = vunpack.c.l.b16 %v615
      %v648 = vunpack.c.l.b16 %v616
      %v649 = vunpack.c.l.b16 %v617
      %v650 = vpack.c.b16 %v635, %v634
      %v651 = vpack.c.b16 %v637, %v636
      %v652 = vpack.c.b16 %v639, %v638
      %v653 = vpack.c.b16 %v641, %v640
      %v654 = vpack.c.b16 %v643, %v642
      %v655 = vpack.c.b16 %v645, %v644
      %v656 = vpack.c.b16 %v647, %v646
      %v657 = vpack.c.b16 %v649, %v648
      %666 = vmatpush.bf16.msra.mxu0 %v657
      %667 = vmatpush.bf16.msra.mxu0 %v656
      %668 = vmatpush.bf16.msra.mxu0 %v655
      %669 = vmatpush.bf16.msra.mxu0 %v654
      %670 = vmatpush.bf16.msra.mxu0 %v653
      %671 = vmatpush.bf16.msra.mxu0 %v652
      %672 = vmatpush.bf16.msra.mxu0 %v651
      %673 = vmatpush.bf16.msra.mxu0 %v650
      %674 = vmatmul.bf16.gmra.mxu0 %v598
      %v675 = vpop.f32.mrf.mxu0
      %v676 = vadd.f32 0.0, %v675
      %v677 = vpop.f32.mrf.mxu0
      %v678 = vadd.f32 0.0, %v677
      %679 = vmatmul.bf16.gmra.mxu0 %v599
      %v680 = vpop.f32.mrf.mxu0
      %v681 = vadd.f32 0.0, %v680
      %v682 = vpop.f32.mrf.mxu0
      %v683 = vadd.f32 0.0, %v682
      %684 = vmatmul.bf16.gmra.mxu0 %v600
      %v685 = vpop.f32.mrf.mxu0
      %v686 = vadd.f32 0.0, %v685
      %v687 = vpop.f32.mrf.mxu0
      %v688 = vadd.f32 0.0, %v687
      %689 = vmatmul.bf16.gmra.mxu0 %v601
      %v690 = vpop.f32.mrf.mxu0
      %v691 = vadd.f32 0.0, %v690
      %v692 = vpop.f32.mrf.mxu0
      %v693 = vadd.f32 0.0, %v692
      %694 = vdwg.mxu0
      %v695 = vadd.f32 %v546, %v676
      %v696 = vadd.f32 %v548, %v678
      %v697 = vadd.f32 %v551, %v681
      %v698 = vadd.f32 %v553, %v683
      %v699 = vadd.f32 %v556, %v686
      %v700 = vadd.f32 %v558, %v688
      %v701 = vadd.f32 %v561, %v691
      %v702 = vadd.f32 %v563, %v693
      %v703 = vpack.c.bf16 %v306, %v305
      %v704 = vpack.c.bf16 %v308, %v307
      %v705 = vpack.c.bf16 %v310, %v309
      %v706 = vpack.c.bf16 %v312, %v311
      %v707 = vld [vmem:[%s3 + $0xc0] sm:$0xf]
      %v708 = vld [vmem:[%s3 + $0xc4] sm:$0xf]
      %v709 = vld [vmem:[%s3 + $0xc8] sm:$0xf]
      %v710 = vld [vmem:[%s3 + $0xcc] sm:$0xf]
      %v711 = vld [vmem:[%s3 + $0xd0] sm:$0xf]
      %v712 = vld [vmem:[%s3 + $0xd4] sm:$0xf]
      %v713 = vld [vmem:[%s3 + $0xd8] sm:$0xf]
      %v714 = vld [vmem:[%s3 + $0xdc] sm:$0xf]
      %v715 = vld [vmem:[%s3 + $0xe0] sm:$0xf]
      %v716 = vld [vmem:[%s3 + $0xe4] sm:$0xf]
      %v717 = vld [vmem:[%s3 + $0xe8] sm:$0xf]
      %v718 = vld [vmem:[%s3 + $0xec] sm:$0xf]
      %v719 = vld [vmem:[%s3 + $0xf0] sm:$0xf]
      %v720 = vld [vmem:[%s3 + $0xf4] sm:$0xf]
      %v721 = vld [vmem:[%s3 + $0xf8] sm:$0xf]
      %v722 = vld [vmem:[%s3 + $0xfc] sm:$0xf]
      %v739 = vunpack.c.l.b16 %v707
      %v740 = vunpack.c.l.b16 %v708
      %v741 = vunpack.c.l.b16 %v709
      %v742 = vunpack.c.l.b16 %v710
      %v743 = vunpack.c.l.b16 %v711
      %v744 = vunpack.c.l.b16 %v712
      %v745 = vunpack.c.l.b16 %v713
      %v746 = vunpack.c.l.b16 %v714
      %v747 = vunpack.c.l.b16 %v715
      %v748 = vunpack.c.l.b16 %v716
      %v749 = vunpack.c.l.b16 %v717
      %v750 = vunpack.c.l.b16 %v718
      %v751 = vunpack.c.l.b16 %v719
      %v752 = vunpack.c.l.b16 %v720
      %v753 = vunpack.c.l.b16 %v721
      %v754 = vunpack.c.l.b16 %v722
      %v755 = vpack.c.b16 %v740, %v739
      %v756 = vpack.c.b16 %v742, %v741
      %v757 = vpack.c.b16 %v744, %v743
      %v758 = vpack.c.b16 %v746, %v745
      %v759 = vpack.c.b16 %v748, %v747
      %v760 = vpack.c.b16 %v750, %v749
      %v761 = vpack.c.b16 %v752, %v751
      %v762 = vpack.c.b16 %v754, %v753
      %771 = vmatpush.bf16.msra.mxu0 %v762
      %772 = vmatpush.bf16.msra.mxu0 %v761
      %773 = vmatpush.bf16.msra.mxu0 %v760
      %774 = vmatpush.bf16.msra.mxu0 %v759
      %775 = vmatpush.bf16.msra.mxu0 %v758
      %776 = vmatpush.bf16.msra.mxu0 %v757
      %777 = vmatpush.bf16.msra.mxu0 %v756
      %778 = vmatpush.bf16.msra.mxu0 %v755
      %779 = vmatmul.bf16.gmra.mxu0 %v703
      %v780 = vpop.f32.mrf.mxu0
      %v781 = vadd.f32 0.0, %v780
      %v782 = vpop.f32.mrf.mxu0
      %v783 = vadd.f32 0.0, %v782
      %784 = vmatmul.bf16.gmra.mxu0 %v704
      %v785 = vpop.f32.mrf.mxu0
      %v786 = vadd.f32 0.0, %v785
      %v787 = vpop.f32.mrf.mxu0
      %v788 = vadd.f32 0.0, %v787
      %789 = vmatmul.bf16.gmra.mxu0 %v705
      %v790 = vpop.f32.mrf.mxu0
      %v791 = vadd.f32 0.0, %v790
      %v792 = vpop.f32.mrf.mxu0
      %v793 = vadd.f32 0.0, %v792
      %794 = vmatmul.bf16.gmra.mxu0 %v706
      %v795 = vpop.f32.mrf.mxu0
      %v796 = vadd.f32 0.0, %v795
      %v797 = vpop.f32.mrf.mxu0
      %v798 = vadd.f32 0.0, %v797
      %799 = vdwg.mxu0
      %v800 = vadd.f32 %v695, %v781
      %v801 = vadd.f32 %v696, %v783
      %v802 = vadd.f32 %v697, %v786
      %v803 = vadd.f32 %v698, %v788
      %v804 = vadd.f32 %v699, %v791
      %v805 = vadd.f32 %v700, %v793
      %v806 = vadd.f32 %v701, %v796
      %v807 = vadd.f32 %v702, %v798
      %v810 = vrot.slane %v312, 1
      %v811 = vrot.slane %v321, 1
      %v812 = vsel %vm358, %v810, %v811
      %v814 = vpack.c.bf16 %v367, %v364
      %v815 = vpack.c.bf16 %v373, %v370
      %v816 = vpack.c.bf16 %v379, %v376
      %v817 = vpack.c.bf16 %v812, %v382
      %v818 = vld [vmem:[%s3 + $0x100] sm:$0xf]
      %v819 = vld [vmem:[%s3 + $0x104] sm:$0xf]
      %v820 = vld [vmem:[%s3 + $0x108] sm:$0xf]
      %v821 = vld [vmem:[%s3 + $0x10c] sm:$0xf]
      %v822 = vld [vmem:[%s3 + $0x110] sm:$0xf]
      %v823 = vld [vmem:[%s3 + $0x114] sm:$0xf]
      %v824 = vld [vmem:[%s3 + $0x118] sm:$0xf]
      %v825 = vld [vmem:[%s3 + $0x11c] sm:$0xf]
      %v826 = vld [vmem:[%s3 + $0x120] sm:$0xf]
      %v827 = vld [vmem:[%s3 + $0x124] sm:$0xf]
      %v828 = vld [vmem:[%s3 + $0x128] sm:$0xf]
      %v829 = vld [vmem:[%s3 + $0x12c] sm:$0xf]
      %v830 = vld [vmem:[%s3 + $0x130] sm:$0xf]
      %v831 = vld [vmem:[%s3 + $0x134] sm:$0xf]
      %v832 = vld [vmem:[%s3 + $0x138] sm:$0xf]
      %v833 = vld [vmem:[%s3 + $0x13c] sm:$0xf]
      %v850 = vunpack.c.l.b16 %v818
      %v851 = vunpack.c.l.b16 %v819
      %v852 = vunpack.c.l.b16 %v820
      %v853 = vunpack.c.l.b16 %v821
      %v854 = vunpack.c.l.b16 %v822
      %v855 = vunpack.c.l.b16 %v823
      %v856 = vunpack.c.l.b16 %v824
      %v857 = vunpack.c.l.b16 %v825
      %v858 = vunpack.c.l.b16 %v826
      %v859 = vunpack.c.l.b16 %v827
      %v860 = vunpack.c.l.b16 %v828
      %v861 = vunpack.c.l.b16 %v829
      %v862 = vunpack.c.l.b16 %v830
      %v863 = vunpack.c.l.b16 %v831
      %v864 = vunpack.c.l.b16 %v832
      %v865 = vunpack.c.l.b16 %v833
      %v866 = vpack.c.b16 %v851, %v850
      %v867 = vpack.c.b16 %v853, %v852
      %v868 = vpack.c.b16 %v855, %v854
      %v869 = vpack.c.b16 %v857, %v856
      %v870 = vpack.c.b16 %v859, %v858
      %v871 = vpack.c.b16 %v861, %v860
      %v872 = vpack.c.b16 %v863, %v862
      %v873 = vpack.c.b16 %v865, %v864
      %882 = vmatpush.bf16.msra.mxu0 %v873
      %883 = vmatpush.bf16.msra.mxu0 %v872
      %884 = vmatpush.bf16.msra.mxu0 %v871
      %885 = vmatpush.bf16.msra.mxu0 %v870
      %886 = vmatpush.bf16.msra.mxu0 %v869
      %887 = vmatpush.bf16.msra.mxu0 %v868
      %888 = vmatpush.bf16.msra.mxu0 %v867
      %889 = vmatpush.bf16.msra.mxu0 %v866
      %890 = vmatmul.bf16.gmra.mxu0 %v814
      %v891 = vpop.f32.mrf.mxu0
      %v892 = vadd.f32 0.0, %v891
      %v893 = vpop.f32.mrf.mxu0
      %v894 = vadd.f32 0.0, %v893
      %895 = vmatmul.bf16.gmra.mxu0 %v815
      %v896 = vpop.f32.mrf.mxu0
      %v897 = vadd.f32 0.0, %v896
      %v898 = vpop.f32.mrf.mxu0
      %v899 = vadd.f32 0.0, %v898
      %900 = vmatmul.bf16.gmra.mxu0 %v816
      %v901 = vpop.f32.mrf.mxu0
      %v902 = vadd.f32 0.0, %v901
      %v903 = vpop.f32.mrf.mxu0
      %v904 = vadd.f32 0.0, %v903
      %905 = vmatmul.bf16.gmra.mxu0 %v817
      %v906 = vpop.f32.mrf.mxu0
      %v907 = vadd.f32 0.0, %v906
      %v908 = vpop.f32.mrf.mxu0
      %v909 = vadd.f32 0.0, %v908
      %910 = vdwg.mxu0
      %v911 = vadd.f32 %v800, %v892
      %v912 = vadd.f32 %v801, %v894
      %v913 = vadd.f32 %v802, %v897
      %v914 = vadd.f32 %v803, %v899
      %v915 = vadd.f32 %v804, %v902
      %v916 = vadd.f32 %v805, %v904
      %v917 = vadd.f32 %v806, %v907
      %v918 = vadd.f32 %v807, %v909
      %v919 = vrot.slane %v312, 2
      %v920 = vrot.slane %v321, 2
      %v921 = vsel %vm565, %v919, %v920
      %v923 = vpack.c.bf16 %v574, %v571
      %v924 = vpack.c.bf16 %v580, %v577
      %v925 = vpack.c.bf16 %v586, %v583
      %v926 = vpack.c.bf16 %v921, %v589
      %v927 = vld [vmem:[%s3 + $0x140] sm:$0xf]
      %v928 = vld [vmem:[%s3 + $0x144] sm:$0xf]
      %v929 = vld [vmem:[%s3 + $0x148] sm:$0xf]
      %v930 = vld [vmem:[%s3 + $0x14c] sm:$0xf]
      %v931 = vld [vmem:[%s3 + $0x150] sm:$0xf]
      %v932 = vld [vmem:[%s3 + $0x154] sm:$0xf]
      %v933 = vld [vmem:[%s3 + $0x158] sm:$0xf]
      %v934 = vld [vmem:[%s3 + $0x15c] sm:$0xf]
      %v935 = vld [vmem:[%s3 + $0x160] sm:$0xf]
      %v936 = vld [vmem:[%s3 + $0x164] sm:$0xf]
      %v937 = vld [vmem:[%s3 + $0x168] sm:$0xf]
      %v938 = vld [vmem:[%s3 + $0x16c] sm:$0xf]
      %v939 = vld [vmem:[%s3 + $0x170] sm:$0xf]
      %v940 = vld [vmem:[%s3 + $0x174] sm:$0xf]
      %v941 = vld [vmem:[%s3 + $0x178] sm:$0xf]
      %v942 = vld [vmem:[%s3 + $0x17c] sm:$0xf]
      %v959 = vunpack.c.l.b16 %v927
      %v960 = vunpack.c.l.b16 %v928
      %v961 = vunpack.c.l.b16 %v929
      %v962 = vunpack.c.l.b16 %v930
      %v963 = vunpack.c.l.b16 %v931
      %v964 = vunpack.c.l.b16 %v932
      %v965 = vunpack.c.l.b16 %v933
      %v966 = vunpack.c.l.b16 %v934
      %v967 = vunpack.c.l.b16 %v935
      %v968 = vunpack.c.l.b16 %v936
      %v969 = vunpack.c.l.b16 %v937
      %v970 = vunpack.c.l.b16 %v938
      %v971 = vunpack.c.l.b16 %v939
      %v972 = vunpack.c.l.b16 %v940
      %v973 = vunpack.c.l.b16 %v941
      %v974 = vunpack.c.l.b16 %v942
      %v975 = vpack.c.b16 %v960, %v959
      %v976 = vpack.c.b16 %v962, %v961
      %v977 = vpack.c.b16 %v964, %v963
      %v978 = vpack.c.b16 %v966, %v965
      %v979 = vpack.c.b16 %v968, %v967
      %v980 = vpack.c.b16 %v970, %v969
      %v981 = vpack.c.b16 %v972, %v971
      %v982 = vpack.c.b16 %v974, %v973
      %991 = vmatpush.bf16.msra.mxu0 %v982
      %992 = vmatpush.bf16.msra.mxu0 %v981
      %993 = vmatpush.bf16.msra.mxu0 %v980
      %994 = vmatpush.bf16.msra.mxu0 %v979
      %995 = vmatpush.bf16.msra.mxu0 %v978
      %996 = vmatpush.bf16.msra.mxu0 %v977
      %997 = vmatpush.bf16.msra.mxu0 %v976
      %998 = vmatpush.bf16.msra.mxu0 %v975
      %999 = vmatmul.bf16.gmra.mxu0 %v923
      %v1000 = vpop.f32.mrf.mxu0
      %v1001 = vadd.f32 0.0, %v1000
      %v1002 = vpop.f32.mrf.mxu0
      %v1003 = vadd.f32 0.0, %v1002
      %1004 = vmatmul.bf16.gmra.mxu0 %v924
      %v1005 = vpop.f32.mrf.mxu0
      %v1006 = vadd.f32 0.0, %v1005
      %v1007 = vpop.f32.mrf.mxu0
      %v1008 = vadd.f32 0.0, %v1007
      %1009 = vmatmul.bf16.gmra.mxu0 %v925
      %v1010 = vpop.f32.mrf.mxu0
      %v1011 = vadd.f32 0.0, %v1010
      %v1012 = vpop.f32.mrf.mxu0
      %v1013 = vadd.f32 0.0, %v1012
      %1014 = vmatmul.bf16.gmra.mxu0 %v926
      %v1015 = vpop.f32.mrf.mxu0
      %v1016 = vadd.f32 0.0, %v1015
      %v1017 = vpop.f32.mrf.mxu0
      %v1018 = vadd.f32 0.0, %v1017
      %1019 = vdwg.mxu0
      %v1020 = vadd.f32 %v911, %v1001
      %v1021 = vadd.f32 %v912, %v1003
      %v1022 = vadd.f32 %v913, %v1006
      %v1023 = vadd.f32 %v914, %v1008
      %v1024 = vadd.f32 %v915, %v1011
      %v1025 = vadd.f32 %v916, %v1013
      %v1026 = vadd.f32 %v917, %v1016
      %v1027 = vadd.f32 %v918, %v1018
      %v1028 = vpack.c.bf16 %v304, %v312
      %v1029 = vld [vmem:[%s3 + $0x180] sm:$0xf]
      %v1030 = vld [vmem:[%s3 + $0x184] sm:$0xf]
      %v1031 = vld [vmem:[%s3 + $0x188] sm:$0xf]
      %v1032 = vld [vmem:[%s3 + $0x18c] sm:$0xf]
      %v1033 = vld [vmem:[%s3 + $0x190] sm:$0xf]
      %v1034 = vld [vmem:[%s3 + $0x194] sm:$0xf]
      %v1035 = vld [vmem:[%s3 + $0x198] sm:$0xf]
      %v1036 = vld [vmem:[%s3 + $0x19c] sm:$0xf]
      %v1037 = vld [vmem:[%s3 + $0x1a0] sm:$0xf]
      %v1038 = vld [vmem:[%s3 + $0x1a4] sm:$0xf]
      %v1039 = vld [vmem:[%s3 + $0x1a8] sm:$0xf]
      %v1040 = vld [vmem:[%s3 + $0x1ac] sm:$0xf]
      %v1041 = vld [vmem:[%s3 + $0x1b0] sm:$0xf]
      %v1042 = vld [vmem:[%s3 + $0x1b4] sm:$0xf]
      %v1043 = vld [vmem:[%s3 + $0x1b8] sm:$0xf]
      %v1044 = vld [vmem:[%s3 + $0x1bc] sm:$0xf]
      %v1061 = vunpack.c.l.b16 %v1029
      %v1062 = vunpack.c.l.b16 %v1030
      %v1063 = vunpack.c.l.b16 %v1031
      %v1064 = vunpack.c.l.b16 %v1032
      %v1065 = vunpack.c.l.b16 %v1033
      %v1066 = vunpack.c.l.b16 %v1034
      %v1067 = vunpack.c.l.b16 %v1035
      %v1068 = vunpack.c.l.b16 %v1036
      %v1069 = vunpack.c.l.b16 %v1037
      %v1070 = vunpack.c.l.b16 %v1038
      %v1071 = vunpack.c.l.b16 %v1039
      %v1072 = vunpack.c.l.b16 %v1040
      %v1073 = vunpack.c.l.b16 %v1041
      %v1074 = vunpack.c.l.b16 %v1042
      %v1075 = vunpack.c.l.b16 %v1043
      %v1076 = vunpack.c.l.b16 %v1044
      %v1077 = vpack.c.b16 %v1062, %v1061
      %v1078 = vpack.c.b16 %v1064, %v1063
      %v1079 = vpack.c.b16 %v1066, %v1065
      %v1080 = vpack.c.b16 %v1068, %v1067
      %v1081 = vpack.c.b16 %v1070, %v1069
      %v1082 = vpack.c.b16 %v1072, %v1071
      %v1083 = vpack.c.b16 %v1074, %v1073
      %v1084 = vpack.c.b16 %v1076, %v1075
      %1093 = vmatpush.bf16.msra.mxu0 %v1084
      %1094 = vmatpush.bf16.msra.mxu0 %v1083
      %1095 = vmatpush.bf16.msra.mxu0 %v1082
      %1096 = vmatpush.bf16.msra.mxu0 %v1081
      %1097 = vmatpush.bf16.msra.mxu0 %v1080
      %1098 = vmatpush.bf16.msra.mxu0 %v1079
      %1099 = vmatpush.bf16.msra.mxu0 %v1078
      %1100 = vmatpush.bf16.msra.mxu0 %v1077
      %1101 = vmatmul.bf16.gmra.mxu0 %v323
      %v1102 = vpop.f32.mrf.mxu0
      %v1103 = vadd.f32 0.0, %v1102
      %v1104 = vpop.f32.mrf.mxu0
      %v1105 = vadd.f32 0.0, %v1104
      %1106 = vmatmul.bf16.gmra.mxu0 %v324
      %v1107 = vpop.f32.mrf.mxu0
      %v1108 = vadd.f32 0.0, %v1107
      %v1109 = vpop.f32.mrf.mxu0
      %v1110 = vadd.f32 0.0, %v1109
      %1111 = vmatmul.bf16.gmra.mxu0 %v325
      %v1112 = vpop.f32.mrf.mxu0
      %v1113 = vadd.f32 0.0, %v1112
      %v1114 = vpop.f32.mrf.mxu0
      %v1115 = vadd.f32 0.0, %v1114
      %1116 = vmatmul.bf16.gmra.mxu0 %v1028
      %v1117 = vpop.f32.mrf.mxu0
      %v1118 = vadd.f32 0.0, %v1117
      %v1119 = vpop.f32.mrf.mxu0
      %v1120 = vadd.f32 0.0, %v1119
      %1121 = vdwg.mxu0
      %v1122 = vadd.f32 %v1020, %v1103
      %v1123 = vadd.f32 %v1021, %v1105
      %v1124 = vadd.f32 %v1022, %v1108
      %v1125 = vadd.f32 %v1023, %v1110
      %v1126 = vadd.f32 %v1024, %v1113
      %v1127 = vadd.f32 %v1025, %v1115
      %v1128 = vadd.f32 %v1026, %v1118
      %v1129 = vadd.f32 %v1027, %v1120
      %v1130 = vpack.c.bf16 %v361, %v812
      %v1131 = vld [vmem:[%s3 + $0x1c0] sm:$0xf]
      %v1132 = vld [vmem:[%s3 + $0x1c4] sm:$0xf]
      %v1133 = vld [vmem:[%s3 + $0x1c8] sm:$0xf]
      %v1134 = vld [vmem:[%s3 + $0x1cc] sm:$0xf]
      %v1135 = vld [vmem:[%s3 + $0x1d0] sm:$0xf]
      %v1136 = vld [vmem:[%s3 + $0x1d4] sm:$0xf]
      %v1137 = vld [vmem:[%s3 + $0x1d8] sm:$0xf]
      %v1138 = vld [vmem:[%s3 + $0x1dc] sm:$0xf]
      %v1139 = vld [vmem:[%s3 + $0x1e0] sm:$0xf]
      %v1140 = vld [vmem:[%s3 + $0x1e4] sm:$0xf]
      %v1141 = vld [vmem:[%s3 + $0x1e8] sm:$0xf]
      %v1142 = vld [vmem:[%s3 + $0x1ec] sm:$0xf]
      %v1143 = vld [vmem:[%s3 + $0x1f0] sm:$0xf]
      %v1144 = vld [vmem:[%s3 + $0x1f4] sm:$0xf]
      %v1145 = vld [vmem:[%s3 + $0x1f8] sm:$0xf]
      %v1146 = vld [vmem:[%s3 + $0x1fc] sm:$0xf]
      %v1163 = vunpack.c.l.b16 %v1131
      %v1164 = vunpack.c.l.b16 %v1132
      %v1165 = vunpack.c.l.b16 %v1133
      %v1166 = vunpack.c.l.b16 %v1134
      %v1167 = vunpack.c.l.b16 %v1135
      %v1168 = vunpack.c.l.b16 %v1136
      %v1169 = vunpack.c.l.b16 %v1137
      %v1170 = vunpack.c.l.b16 %v1138
      %v1171 = vunpack.c.l.b16 %v1139
      %v1172 = vunpack.c.l.b16 %v1140
      %v1173 = vunpack.c.l.b16 %v1141
      %v1174 = vunpack.c.l.b16 %v1142
      %v1175 = vunpack.c.l.b16 %v1143
      %v1176 = vunpack.c.l.b16 %v1144
      %v1177 = vunpack.c.l.b16 %v1145
      %v1178 = vunpack.c.l.b16 %v1146
      %v1179 = vpack.c.b16 %v1164, %v1163
      %v1180 = vpack.c.b16 %v1166, %v1165
      %v1181 = vpack.c.b16 %v1168, %v1167
      %v1182 = vpack.c.b16 %v1170, %v1169
      %v1183 = vpack.c.b16 %v1172, %v1171
      %v1184 = vpack.c.b16 %v1174, %v1173
      %v1185 = vpack.c.b16 %v1176, %v1175
      %v1186 = vpack.c.b16 %v1178, %v1177
      %1195 = vmatpush.bf16.msra.mxu0 %v1186
      %1196 = vmatpush.bf16.msra.mxu0 %v1185
      %1197 = vmatpush.bf16.msra.mxu0 %v1184
      %1198 = vmatpush.bf16.msra.mxu0 %v1183
      %1199 = vmatpush.bf16.msra.mxu0 %v1182
      %1200 = vmatpush.bf16.msra.mxu0 %v1181
      %1201 = vmatpush.bf16.msra.mxu0 %v1180
      %1202 = vmatpush.bf16.msra.mxu0 %v1179
      %1203 = vmatmul.bf16.gmra.mxu0 %v392
      %v1204 = vpop.f32.mrf.mxu0
      %v1205 = vadd.f32 0.0, %v1204
      %v1206 = vpop.f32.mrf.mxu0
      %v1207 = vadd.f32 0.0, %v1206
      %1208 = vmatmul.bf16.gmra.mxu0 %v393
      %v1209 = vpop.f32.mrf.mxu0
      %v1210 = vadd.f32 0.0, %v1209
      %v1211 = vpop.f32.mrf.mxu0
      %v1212 = vadd.f32 0.0, %v1211
      %1213 = vmatmul.bf16.gmra.mxu0 %v394
      %v1214 = vpop.f32.mrf.mxu0
      %v1215 = vadd.f32 0.0, %v1214
      %v1216 = vpop.f32.mrf.mxu0
      %v1217 = vadd.f32 0.0, %v1216
      %1218 = vmatmul.bf16.gmra.mxu0 %v1130
      %v1219 = vpop.f32.mrf.mxu0
      %v1220 = vadd.f32 0.0, %v1219
      %v1221 = vpop.f32.mrf.mxu0
      %v1222 = vadd.f32 0.0, %v1221
      %1223 = vdwg.mxu0
      %v1224 = vadd.f32 %v1122, %v1205
      %v1225 = vadd.f32 %v1123, %v1207
      %v1226 = vadd.f32 %v1124, %v1210
      %v1227 = vadd.f32 %v1125, %v1212
      %v1228 = vadd.f32 %v1126, %v1215
      %v1229 = vadd.f32 %v1127, %v1217
      %v1230 = vadd.f32 %v1128, %v1220
      %v1231 = vadd.f32 %v1129, %v1222
      %v1232 = vpack.c.bf16 %v568, %v921
      %v1233 = vld [vmem:[%s3 + $0x200] sm:$0xf]
      %v1234 = vld [vmem:[%s3 + $0x204] sm:$0xf]
      %v1235 = vld [vmem:[%s3 + $0x208] sm:$0xf]
      %v1236 = vld [vmem:[%s3 + $0x20c] sm:$0xf]
      %v1237 = vld [vmem:[%s3 + $0x210] sm:$0xf]
      %v1238 = vld [vmem:[%s3 + $0x214] sm:$0xf]
      %v1239 = vld [vmem:[%s3 + $0x218] sm:$0xf]
      %v1240 = vld [vmem:[%s3 + $0x21c] sm:$0xf]
      %v1241 = vld [vmem:[%s3 + $0x220] sm:$0xf]
      %v1242 = vld [vmem:[%s3 + $0x224] sm:$0xf]
      %v1243 = vld [vmem:[%s3 + $0x228] sm:$0xf]
      %v1244 = vld [vmem:[%s3 + $0x22c] sm:$0xf]
      %v1245 = vld [vmem:[%s3 + $0x230] sm:$0xf]
      %v1246 = vld [vmem:[%s3 + $0x234] sm:$0xf]
      %v1247 = vld [vmem:[%s3 + $0x238] sm:$0xf]
      %v1248 = vld [vmem:[%s3 + $0x23c] sm:$0xf]
      %v1265 = vunpack.c.l.b16 %v1233
      %v1266 = vunpack.c.l.b16 %v1234
      %v1267 = vunpack.c.l.b16 %v1235
      %v1268 = vunpack.c.l.b16 %v1236
      %v1269 = vunpack.c.l.b16 %v1237
      %v1270 = vunpack.c.l.b16 %v1238
      %v1271 = vunpack.c.l.b16 %v1239
      %v1272 = vunpack.c.l.b16 %v1240
      %v1273 = vunpack.c.l.b16 %v1241
      %v1274 = vunpack.c.l.b16 %v1242
      %v1275 = vunpack.c.l.b16 %v1243
      %v1276 = vunpack.c.l.b16 %v1244
      %v1277 = vunpack.c.l.b16 %v1245
      %v1278 = vunpack.c.l.b16 %v1246
      %v1279 = vunpack.c.l.b16 %v1247
      %v1280 = vunpack.c.l.b16 %v1248
      %v1281 = vpack.c.b16 %v1266, %v1265
      %v1282 = vpack.c.b16 %v1268, %v1267
      %v1283 = vpack.c.b16 %v1270, %v1269
      %v1284 = vpack.c.b16 %v1272, %v1271
      %v1285 = vpack.c.b16 %v1274, %v1273
      %v1286 = vpack.c.b16 %v1276, %v1275
      %v1287 = vpack.c.b16 %v1278, %v1277
      %v1288 = vpack.c.b16 %v1280, %v1279
      %1297 = vmatpush.bf16.msra.mxu0 %v1288
      %1298 = vmatpush.bf16.msra.mxu0 %v1287
      %1299 = vmatpush.bf16.msra.mxu0 %v1286
      %1300 = vmatpush.bf16.msra.mxu0 %v1285
      %1301 = vmatpush.bf16.msra.mxu0 %v1284
      %1302 = vmatpush.bf16.msra.mxu0 %v1283
      %1303 = vmatpush.bf16.msra.mxu0 %v1282
      %1304 = vmatpush.bf16.msra.mxu0 %v1281
      %1305 = vmatmul.bf16.gmra.mxu0 %v599
      %v1306 = vpop.f32.mrf.mxu0
      %v1307 = vadd.f32 0.0, %v1306
      %v1308 = vpop.f32.mrf.mxu0
      %v1309 = vadd.f32 0.0, %v1308
      %1310 = vmatmul.bf16.gmra.mxu0 %v600
      %v1311 = vpop.f32.mrf.mxu0
      %v1312 = vadd.f32 0.0, %v1311
      %v1313 = vpop.f32.mrf.mxu0
      %v1314 = vadd.f32 0.0, %v1313
      %1315 = vmatmul.bf16.gmra.mxu0 %v601
      %v1316 = vpop.f32.mrf.mxu0
      %v1317 = vadd.f32 0.0, %v1316
      %v1318 = vpop.f32.mrf.mxu0
      %v1319 = vadd.f32 0.0, %v1318
      %1320 = vmatmul.bf16.gmra.mxu0 %v1232
      %v1321 = vpop.f32.mrf.mxu0
      %v1322 = vadd.f32 0.0, %v1321
      %v1323 = vpop.f32.mrf.mxu0
      %v1324 = vadd.f32 0.0, %v1323
      %1325 = vdwg.mxu0
      %v1326 = vadd.f32 %v1224, %v1307
      %v1327 = vadd.f32 %v1225, %v1309
      %v1328 = vadd.f32 %v1226, %v1312
      %v1329 = vadd.f32 %v1227, %v1314
      %v1330 = vadd.f32 %v1228, %v1317
      %v1331 = vadd.f32 %v1229, %v1319
      %v1332 = vadd.f32 %v1230, %v1322
      %v1333 = vadd.f32 %v1231, %v1324
      %1334 = vst [vmem:[%s231] sm:$0xff] %v1326
      %1335 = vst [vmem:[%s231 + $0x8] sm:$0xff] %v1327
      %1336 = vst [vmem:[%s231 + $0x10] sm:$0xff] %v1328
      %1337 = vst [vmem:[%s231 + $0x18] sm:$0xff] %v1329
      %1338 = vst [vmem:[%s231 + $0x20] sm:$0xff] %v1330
      %1339 = vst [vmem:[%s231 + $0x28] sm:$0xff] %v1331
      %1340 = vst [vmem:[%s231 + $0x30] sm:$0xff] %v1332
      %1341 = vst [vmem:[%s231 + $0x38] sm:$0xff] %v1333
      %v1342 = vadd.f32 %v1326, %v1327
      %v1343 = vadd.f32 %v1342, %v1328
      %v1344 = vadd.f32 %v1343, %v1329
      %v1345 = vadd.f32 %v1344, %v1330
      %v1346 = vadd.f32 %v1345, %v1331
      %v1347 = vadd.f32 %v1346, %v1332
      %v1348 = vadd.f32 %v1347, %v1333
      %v1349 = vrot.slane %v1348, 4
      %v1350 = vadd.f32 %v1348, %v1349
      %v1351 = vrot.slane %v1350, 2
      %v1352 = vadd.f32 %v1350, %v1351
      %v1353 = vrot.slane %v1352, 1
      %v1354 = vadd.f32 %v1352, %v1353
      %v1355 = vmul.f32 %v1326, %v1326
      %v1356 = vmul.f32 %v1327, %v1327
      %v1357 = vmul.f32 %v1328, %v1328
      %v1358 = vmul.f32 %v1329, %v1329
      %v1359 = vmul.f32 %v1330, %v1330
      %v1360 = vmul.f32 %v1331, %v1331
      %v1361 = vmul.f32 %v1332, %v1332
      %v1362 = vmul.f32 %v1333, %v1333
      %v1363 = vadd.f32 %v1355, %v1356
      %v1364 = vadd.f32 %v1363, %v1357
      %v1365 = vadd.f32 %v1364, %v1358
      %v1366 = vadd.f32 %v1365, %v1359
      %v1367 = vadd.f32 %v1366, %v1360
      %v1368 = vadd.f32 %v1367, %v1361
      %v1369 = vadd.f32 %v1368, %v1362
      %v1370 = vrot.slane %v1369, 4
      %v1371 = vadd.f32 %v1369, %v1370
      %v1372 = vrot.slane %v1371, 2
      %v1373 = vadd.f32 %v1371, %v1372
      %v1374 = vrot.slane %v1373, 1
      %v1375 = vadd.f32 %v1373, %v1374
      %v1376 = vsel %vm303, %v1354, %v1375
      %vm1377 = vcmask 1041408
      %v1378 = vsel %vm1377, %v1376, 0.0
      %1379 = vst [vmem:[%s235] sm:$0xff] %v1378
      %p1380 = scmp.lt.s32.totalorder %s17, 1
      %s1381 = scalar_select %p1380, %s17, 1
      %s1382 = smul.addr %s1381, 8
      %s1383 = smul.addr %s1382, 8
      %s1384 = scalar_lea.vmem %s4, %s1383
      %p1385 = scmp.lt.s32.totalorder %s17, 1
      %s1386 = scalar_select %p1385, %s17, 1
      %s1387 = smul.addr %s1386, 8
      %s1388 = scalar_lea.vmem %s5, %s1387
      // Predicated region
      $region37: #{bottleneck_forward.5} parent=35 // pred_check
        %p1389 = pneg %p124
      $region38: #{bottleneck_forward.5} parent=35 // pred_check_branch
        %1391 = sbr.rel (%p1389) target = $region40
      $region39: #{bottleneck_forward.5} parent=35 // pred_region
        _
      $region40: #{bottleneck_forward.5} parent=35 // pred_fallthru
        _
      // Predicated region
      $region41: #{bottleneck_forward.5} parent=35 // pred_check
        %p1392 = pneg %p150
      $region42: #{bottleneck_forward.5} parent=35 // pred_check_branch
        %1394 = sbr.rel (%p1392) target = $region44
      $region43: #{bottleneck_forward.5} parent=35 // pred_region
        _
      $region44: #{bottleneck_forward.5} parent=35 // pred_fallthru
        _
    $region36: #{bottleneck_forward.5} parent=5 // pred_fallthru
      _
    %p1395 = scmp.le.s32.totalorder 2, %s12
    // Predicated region
    $region45: #{bottleneck_forward.5} parent=5 // pred_check
      %p1396 = pneg %p1395
    $region46: #{bottleneck_forward.5} parent=5 // pred_check_branch
      %1398 = sbr.rel (%p1396) target = $region48
    $region47: #{bottleneck_forward.5} parent=5 // pred_region
      %s1399 = ssub.s32 %s12, 2
      // Predicated region
      $region49: #{bottleneck_forward.5} parent=47 // pred_check
        %p1400 = pneg %p130
      $region50: #{bottleneck_forward.5} parent=47 // pred_check_branch
        %1402 = sbr.rel (%p1400) target = $region52
      $region51: #{bottleneck_forward.5} parent=47 // pred_region
        %p1403 = scmp.lt.s32.totalorder %s18, 1
        %s1404 = scalar_select %p1403, %s18, 1
        %s1405 = smul.addr %s1404, 8
        %s1406 = smul.addr %s1405, 8
        %s1407 = scalar_lea.vmem %s4, %s1406
      $region52: #{bottleneck_forward.5} parent=47 // pred_fallthru
        _
      // Predicated region
      $region53: #{bottleneck_forward.5} parent=47 // pred_check
        %p1408 = pneg %p156
      $region54: #{bottleneck_forward.5} parent=47 // pred_check_branch
        %1410 = sbr.rel (%p1408) target = $region56
      $region55: #{bottleneck_forward.5} parent=47 // pred_region
        %p1411 = scmp.lt.s32.totalorder %s18, 1
        %s1412 = scalar_select %p1411, %s18, 1
        %s1413 = smul.addr %s1412, 8
        %s1414 = scalar_lea.vmem %s5, %s1413
      $region56: #{bottleneck_forward.5} parent=47 // pred_fallthru
        _
    $region48: #{bottleneck_forward.5} parent=5 // pred_fallthru
      _
  $region6: #{bottleneck_forward.5} parent=0 // loop_footer
    %s16 = sadd.s32 1, %s12
  $region7: #{bottleneck_forward.5} parent=0 // loop_footer_branch
    %11 = sbr.rel target = $region3
  $region8: #{bottleneck_forward.5} parent=0 // loop_exit
    _

</llo_original>
